<compile_context>
chip_gen: v7x
topology: tpu7x:2x2x1
jax: 0.10.0
libtpu: 0.0.40
codegen_flags: <defaults>
</compile_context>

<pallas_src>
import functools

import jax
import jax.numpy as jnp
from jax.experimental import pallas as pl
from jax.experimental.pallas import tpu as pltpu

KSIZE = 7
PAD = (KSIZE - 1) // 2  # 3


def _roll_flat(v, shift, size):
    """Static circular shift along the flattened (lane) axis."""
    s = shift % size
    if s == 0:
        return v
    return pltpu.roll(v, s, axis=1)


def spatial_gate_kernel(w_ref, rc_ref, x_ref, o_ref, *, H, W):
    # w_ref : (2*7*7,) f32 conv weights in SMEM (OIHW flattened, O=1)
    # rc_ref: (2, H*W) int32 -- row index / col index of each flat position
    # x_ref : (1, C, H*W) VMEM tile for one batch element (lane axis = H*W)
    # o_ref : (1, C, H*W) output tile
    HW = H * W
    x = x_ref[0]                                                   # (C, HW)
    C = x.shape[0]

    # Channel pooling: lane-dense, sublane-direction reductions over C.
    pooled_max = jnp.max(x, axis=0, keepdims=True)                 # (1, HW)
    pooled_mean = jnp.sum(x, axis=0, keepdims=True) * (1.0 / C)    # (1, HW)

    rc = rc_ref[...]                                               # (2, HW)
    row = rc[0:1, :]                                               # (1, HW)
    col = rc[1:2, :]                                               # (1, HW)

    # Precompute the 7 row-validity and 7 col-validity masks (zero padding).
    row_ok = []
    col_ok = []
    for t in range(KSIZE):
        d = t - PAD
        row_ok.append((row >= -d) & (row < H - d))
        col_ok.append((col >= -d) & (col < W - d))

    # 7x7 cross-correlation, 2 input channels -> 1 output channel (no bias).
    # Unrolled over the 49 spatial taps; horizontal/vertical shifts go to the
    # XLU via pltpu.roll and boundary handling is a per-tap select.
    acc = jnp.zeros((1, HW), jnp.float32)
    for p in range(KSIZE):
        dp = p - PAD
        for q in range(KSIZE):
            dq = q - PAD
            shift = -(dp * W + dq)                      # static python int
            r_max = _roll_flat(pooled_max, shift, HW)
            r_mean = _roll_flat(pooled_mean, shift, HW)
            w_max = w_ref[p * KSIZE + q]                           # scalar
            w_mean = w_ref[KSIZE * KSIZE + p * KSIZE + q]          # scalar
            tap = w_max * r_max + w_mean * r_mean
            mask = row_ok[p] & col_ok[q]
            acc = acc + jnp.where(mask, tap, 0.0)

    scale = jax.nn.sigmoid(acc)                                    # (1, HW)
    o_ref[0] = (x * scale).astype(o_ref.dtype)                     # bcast over C


def spatial_gate(x, w):
    """x: (N, C, H, W) float32; w: (1, 2, 7, 7) float32 conv weight (OIHW)."""
    N, C, H, W = x.shape
    HW = H * W

    # Lane-dense flattening of the spatial dims (free bitcast in XLA for NCHW).
    x_flat = x.reshape(N, C, HW)
    w_flat = w.reshape(-1).astype(jnp.float32)                     # (98,)

    flat_idx = jnp.arange(HW, dtype=jnp.int32)
    rowcol = jnp.stack([flat_idx // W, flat_idx % W], axis=0)      # (2, HW)

    kernel = functools.partial(spatial_gate_kernel, H=H, W=W)

    out_flat = pl.pallas_call(
        kernel,
        out_shape=jax.ShapeDtypeStruct((N, C, HW), x.dtype),
        grid_spec=pltpu.PrefetchScalarGridSpec(
            num_scalar_prefetch=0,
            grid=(N,),
            in_specs=[
                pl.BlockSpec(memory_space=pltpu.SMEM),             # weights
                pl.BlockSpec((2, HW), lambda n: (0, 0)),           # row/col idx
                pl.BlockSpec((1, C, HW), lambda n: (n, 0, 0)),     # x tile
            ],
            out_specs=pl.BlockSpec((1, C, HW), lambda n: (n, 0, 0)),
        ),
        compiler_params=pltpu.CompilerParams(
            dimension_semantics=("parallel",),
        ),
    )(w_flat, rowcol, x_flat)

    return out_flat.reshape(N, C, H, W)


def spatial_gate_reference(x, w):
    """Plain-JAX reference matching the PyTorch SpatialGate forward."""
    pmax = jnp.max(x, axis=1, keepdims=True)
    pmean = jnp.mean(x, axis=1, keepdims=True)
    pooled = jnp.concatenate([pmax, pmean], axis=1)                # (N, 2, H, W)
    out = jax.lax.conv_general_dilated(
        pooled, w, window_strides=(1, 1),
        padding=((PAD, PAD), (PAD, PAD)),
        dimension_numbers=("NCHW", "OIHW", "NCHW"),
    )
    return x * jax.nn.sigmoid(out)


if __name__ == "__main__":
    key = jax.random.PRNGKey(0)
    kx, kw = jax.random.split(key)

    N, C, H, W = 2, 4, 16, 16
    x = jax.random.normal(kx, (N, C, H, W), dtype=jnp.float32)
    # Deterministic synthetic conv weight, shape (out=1, in=2, 7, 7).
    w = 0.1 * jax.random.normal(kw, (1, 2, KSIZE, KSIZE), dtype=jnp.float32)

    out = spatial_gate(x, w)
    out = jax.block_until_ready(out)

    ref = spatial_gate_reference(x, w)
    assert out.shape == (N, C, H, W)
    assert jnp.allclose(out, ref, atol=1e-5, rtol=1e-5), "mismatch vs reference"

    print("KERNEL_OK")
</pallas_src>

<mosaic_0001>
module attributes {stable_mosaic.version = 11 : i64} {
  func.func @spatial_gate_kernel(%arg0: i32, %arg1: memref<98xf32, #tpu.memory_space<smem>>, %arg2: memref<2x256xi32, #tpu.memory_space<vmem>>, %arg3: memref<1x4x256xf32, #tpu.memory_space<vmem>>, %arg4: memref<1x4x256xf32, #tpu.memory_space<vmem>>) attributes {dimension_semantics = [#tpu.dimension_semantics<parallel>], iteration_bounds = array<i64: 2>, scalar_prefetch = 0 : i64, scratch_operands = 0 : i64, tpu.core_type = #tpu.core_type<tc>, window_params = [{transform_indices = @transform_0, window_bounds = array<i64: 98>}, {pipeline_mode = #tpu.pipeline_mode<synchronous>, transform_indices = @transform_1, window_bounds = array<i64: 2, 256>}, {transform_indices = @transform_2, window_bounds = array<i64: 1, 4, 256>}, {transform_indices = @transform_3, window_bounds = array<i64: 1, 4, 256>}]} {
    %c0 = arith.constant 0 : index
    %c0_0 = arith.constant 0 : index
    %c0_1 = arith.constant 0 : index
    %0 = vector.load %arg3[%c0, %c0_0, %c0_1] : memref<1x4x256xf32, #tpu.memory_space<vmem>>, vector<1x4x256xf32>
    %1 = vector.shape_cast %0 : vector<1x4x256xf32> to vector<4x256xf32>
    %cst = arith.constant dense<0xFF800000> : vector<256xf32>
    %2 = vector.multi_reduction <maximumf>, %1, %cst [0] : vector<4x256xf32> to vector<256xf32>
    %3 = vector.shape_cast %2 : vector<256xf32> to vector<1x256xf32>
    %cst_2 = arith.constant dense<0.000000e+00> : vector<256xf32>
    %4 = vector.multi_reduction <add>, %1, %cst_2 [0] : vector<4x256xf32> to vector<256xf32>
    %5 = vector.shape_cast %4 : vector<256xf32> to vector<1x256xf32>
    %cst_3 = arith.constant 2.500000e-01 : f32
    %6 = vector.broadcast %cst_3 : f32 to vector<1x256xf32>
    %7 = arith.mulf %5, %6 : vector<1x256xf32>
    %c0_4 = arith.constant 0 : index
    %c0_5 = arith.constant 0 : index
    %8 = vector.load %arg2[%c0_4, %c0_5] : memref<2x256xi32, #tpu.memory_space<vmem>>, vector<2x256xi32>
    %9 = vector.extract_strided_slice %8 {offsets = [0, 0], sizes = [1, 256], strides = [1, 1]} : vector<2x256xi32> to vector<1x256xi32>
    %10 = vector.extract_strided_slice %8 {offsets = [1, 0], sizes = [1, 256], strides = [1, 1]} : vector<2x256xi32> to vector<1x256xi32>
    %c3_i32 = arith.constant 3 : i32
    %11 = vector.broadcast %c3_i32 : i32 to vector<1x256xi32>
    %12 = arith.cmpi sge, %9, %11 : vector<1x256xi32>
    %c19_i32 = arith.constant 19 : i32
    %13 = vector.broadcast %c19_i32 : i32 to vector<1x256xi32>
    %14 = arith.cmpi slt, %9, %13 : vector<1x256xi32>
    %15 = arith.andi %12, %14 : vector<1x256xi1>
    %c3_i32_6 = arith.constant 3 : i32
    %16 = vector.broadcast %c3_i32_6 : i32 to vector<1x256xi32>
    %17 = arith.cmpi sge, %10, %16 : vector<1x256xi32>
    %c19_i32_7 = arith.constant 19 : i32
    %18 = vector.broadcast %c19_i32_7 : i32 to vector<1x256xi32>
    %19 = arith.cmpi slt, %10, %18 : vector<1x256xi32>
    %20 = arith.andi %17, %19 : vector<1x256xi1>
    %c2_i32 = arith.constant 2 : i32
    %21 = vector.broadcast %c2_i32 : i32 to vector<1x256xi32>
    %22 = arith.cmpi sge, %9, %21 : vector<1x256xi32>
    %c18_i32 = arith.constant 18 : i32
    %23 = vector.broadcast %c18_i32 : i32 to vector<1x256xi32>
    %24 = arith.cmpi slt, %9, %23 : vector<1x256xi32>
    %25 = arith.andi %22, %24 : vector<1x256xi1>
    %c2_i32_8 = arith.constant 2 : i32
    %26 = vector.broadcast %c2_i32_8 : i32 to vector<1x256xi32>
    %27 = arith.cmpi sge, %10, %26 : vector<1x256xi32>
    %c18_i32_9 = arith.constant 18 : i32
    %28 = vector.broadcast %c18_i32_9 : i32 to vector<1x256xi32>
    %29 = arith.cmpi slt, %10, %28 : vector<1x256xi32>
    %30 = arith.andi %27, %29 : vector<1x256xi1>
    %c1_i32 = arith.constant 1 : i32
    %31 = vector.broadcast %c1_i32 : i32 to vector<1x256xi32>
    %32 = arith.cmpi sge, %9, %31 : vector<1x256xi32>
    %c17_i32 = arith.constant 17 : i32
    %33 = vector.broadcast %c17_i32 : i32 to vector<1x256xi32>
    %34 = arith.cmpi slt, %9, %33 : vector<1x256xi32>
    %35 = arith.andi %32, %34 : vector<1x256xi1>
    %c1_i32_10 = arith.constant 1 : i32
    %36 = vector.broadcast %c1_i32_10 : i32 to vector<1x256xi32>
    %37 = arith.cmpi sge, %10, %36 : vector<1x256xi32>
    %c17_i32_11 = arith.constant 17 : i32
    %38 = vector.broadcast %c17_i32_11 : i32 to vector<1x256xi32>
    %39 = arith.cmpi slt, %10, %38 : vector<1x256xi32>
    %40 = arith.andi %37, %39 : vector<1x256xi1>
    %c0_i32 = arith.constant 0 : i32
    %41 = vector.broadcast %c0_i32 : i32 to vector<1x256xi32>
    %42 = arith.cmpi sge, %9, %41 : vector<1x256xi32>
    %c16_i32 = arith.constant 16 : i32
    %43 = vector.broadcast %c16_i32 : i32 to vector<1x256xi32>
    %44 = arith.cmpi slt, %9, %43 : vector<1x256xi32>
    %45 = arith.andi %42, %44 : vector<1x256xi1>
    %c0_i32_12 = arith.constant 0 : i32
    %46 = vector.broadcast %c0_i32_12 : i32 to vector<1x256xi32>
    %47 = arith.cmpi sge, %10, %46 : vector<1x256xi32>
    %c16_i32_13 = arith.constant 16 : i32
    %48 = vector.broadcast %c16_i32_13 : i32 to vector<1x256xi32>
    %49 = arith.cmpi slt, %10, %48 : vector<1x256xi32>
    %50 = arith.andi %47, %49 : vector<1x256xi1>
    %c-1_i32 = arith.constant -1 : i32
    %51 = vector.broadcast %c-1_i32 : i32 to vector<1x256xi32>
    %52 = arith.cmpi sge, %9, %51 : vector<1x256xi32>
    %c15_i32 = arith.constant 15 : i32
    %53 = vector.broadcast %c15_i32 : i32 to vector<1x256xi32>
    %54 = arith.cmpi slt, %9, %53 : vector<1x256xi32>
    %55 = arith.andi %52, %54 : vector<1x256xi1>
    %c-1_i32_14 = arith.constant -1 : i32
    %56 = vector.broadcast %c-1_i32_14 : i32 to vector<1x256xi32>
    %57 = arith.cmpi sge, %10, %56 : vector<1x256xi32>
    %c15_i32_15 = arith.constant 15 : i32
    %58 = vector.broadcast %c15_i32_15 : i32 to vector<1x256xi32>
    %59 = arith.cmpi slt, %10, %58 : vector<1x256xi32>
    %60 = arith.andi %57, %59 : vector<1x256xi1>
    %c-2_i32 = arith.constant -2 : i32
    %61 = vector.broadcast %c-2_i32 : i32 to vector<1x256xi32>
    %62 = arith.cmpi sge, %9, %61 : vector<1x256xi32>
    %c14_i32 = arith.constant 14 : i32
    %63 = vector.broadcast %c14_i32 : i32 to vector<1x256xi32>
    %64 = arith.cmpi slt, %9, %63 : vector<1x256xi32>
    %65 = arith.andi %62, %64 : vector<1x256xi1>
    %c-2_i32_16 = arith.constant -2 : i32
    %66 = vector.broadcast %c-2_i32_16 : i32 to vector<1x256xi32>
    %67 = arith.cmpi sge, %10, %66 : vector<1x256xi32>
    %c14_i32_17 = arith.constant 14 : i32
    %68 = vector.broadcast %c14_i32_17 : i32 to vector<1x256xi32>
    %69 = arith.cmpi slt, %10, %68 : vector<1x256xi32>
    %70 = arith.andi %67, %69 : vector<1x256xi1>
    %c-3_i32 = arith.constant -3 : i32
    %71 = vector.broadcast %c-3_i32 : i32 to vector<1x256xi32>
    %72 = arith.cmpi sge, %9, %71 : vector<1x256xi32>
    %c13_i32 = arith.constant 13 : i32
    %73 = vector.broadcast %c13_i32 : i32 to vector<1x256xi32>
    %74 = arith.cmpi slt, %9, %73 : vector<1x256xi32>
    %75 = arith.andi %72, %74 : vector<1x256xi1>
    %c-3_i32_18 = arith.constant -3 : i32
    %76 = vector.broadcast %c-3_i32_18 : i32 to vector<1x256xi32>
    %77 = arith.cmpi sge, %10, %76 : vector<1x256xi32>
    %c13_i32_19 = arith.constant 13 : i32
    %78 = vector.broadcast %c13_i32_19 : i32 to vector<1x256xi32>
    %79 = arith.cmpi slt, %10, %78 : vector<1x256xi32>
    %80 = arith.andi %77, %79 : vector<1x256xi1>
    %cst_20 = arith.constant 0.000000e+00 : f32
    %81 = vector.broadcast %cst_20 : f32 to vector<1x256xf32>
    %c51_i32 = arith.constant 51 : i32
    %82 = tpu.dynamic_rotate %3 by %c51_i32 dim 1 : vector<1x256xf32>, i32 -> vector<1x256xf32>
    %c51_i32_21 = arith.constant 51 : i32
    %83 = tpu.dynamic_rotate %7 by %c51_i32_21 dim 1 : vector<1x256xf32>, i32 -> vector<1x256xf32>
    %c0_22 = arith.constant 0 : index
    %84 = memref.load %arg1[%c0_22] : memref<98xf32, #tpu.memory_space<smem>>
    %c49 = arith.constant 49 : index
    %85 = memref.load %arg1[%c49] : memref<98xf32, #tpu.memory_space<smem>>
    %86 = vector.broadcast %84 : f32 to vector<1x256xf32>
    %87 = arith.mulf %86, %82 : vector<1x256xf32>
    %88 = vector.broadcast %85 : f32 to vector<1x256xf32>
    %89 = arith.mulf %88, %83 : vector<1x256xf32>
    %90 = arith.addf %87, %89 : vector<1x256xf32>
    %91 = arith.andi %15, %20 : vector<1x256xi1>
    %cst_23 = arith.constant 0.000000e+00 : f32
    %92 = vector.broadcast %cst_23 : f32 to vector<1x256xf32>
    %93 = arith.select %91, %90, %92 : vector<1x256xi1>, vector<1x256xf32>
    %94 = arith.addf %81, %93 : vector<1x256xf32>
    %c50_i32 = arith.constant 50 : i32
    %95 = tpu.dynamic_rotate %3 by %c50_i32 dim 1 : vector<1x256xf32>, i32 -> vector<1x256xf32>
    %c50_i32_24 = arith.constant 50 : i32
    %96 = tpu.dynamic_rotate %7 by %c50_i32_24 dim 1 : vector<1x256xf32>, i32 -> vector<1x256xf32>
    %c1 = arith.constant 1 : index
    %97 = memref.load %arg1[%c1] : memref<98xf32, #tpu.memory_space<smem>>
    %c50 = arith.constant 50 : index
    %98 = memref.load %arg1[%c50] : memref<98xf32, #tpu.memory_space<smem>>
    %99 = vector.broadcast %97 : f32 to vector<1x256xf32>
    %100 = arith.mulf %99, %95 : vector<1x256xf32>
    %101 = vector.broadcast %98 : f32 to vector<1x256xf32>
    %102 = arith.mulf %101, %96 : vector<1x256xf32>
    %103 = arith.addf %100, %102 : vector<1x256xf32>
    %104 = arith.andi %15, %30 : vector<1x256xi1>
    %cst_25 = arith.constant 0.000000e+00 : f32
    %105 = vector.broadcast %cst_25 : f32 to vector<1x256xf32>
    %106 = arith.select %104, %103, %105 : vector<1x256xi1>, vector<1x256xf32>
    %107 = arith.addf %94, %106 : vector<1x256xf32>
    %c49_i32 = arith.constant 49 : i32
    %108 = tpu.dynamic_rotate %3 by %c49_i32 dim 1 : vector<1x256xf32>, i32 -> vector<1x256xf32>
    %c49_i32_26 = arith.constant 49 : i32
    %109 = tpu.dynamic_rotate %7 by %c49_i32_26 dim 1 : vector<1x256xf32>, i32 -> vector<1x256xf32>
    %c2 = arith.constant 2 : index
    %110 = memref.load %arg1[%c2] : memref<98xf32, #tpu.memory_space<smem>>
    %c51 = arith.constant 51 : index
    %111 = memref.load %arg1[%c51] : memref<98xf32, #tpu.memory_space<smem>>
    %112 = vector.broadcast %110 : f32 to vector<1x256xf32>
    %113 = arith.mulf %112, %108 : vector<1x256xf32>
    %114 = vector.broadcast %111 : f32 to vector<1x256xf32>
    %115 = arith.mulf %114, %109 : vector<1x256xf32>
    %116 = arith.addf %113, %115 : vector<1x256xf32>
    %117 = arith.andi %15, %40 : vector<1x256xi1>
    %cst_27 = arith.constant 0.000000e+00 : f32
    %118 = vector.broadcast %cst_27 : f32 to vector<1x256xf32>
    %119 = arith.select %117, %116, %118 : vector<1x256xi1>, vector<1x256xf32>
    %120 = arith.addf %107, %119 : vector<1x256xf32>
    %c48_i32 = arith.constant 48 : i32
    %121 = tpu.dynamic_rotate %3 by %c48_i32 dim 1 : vector<1x256xf32>, i32 -> vector<1x256xf32>
    %c48_i32_28 = arith.constant 48 : i32
    %122 = tpu.dynamic_rotate %7 by %c48_i32_28 dim 1 : vector<1x256xf32>, i32 -> vector<1x256xf32>
    %c3 = arith.constant 3 : index
    %123 = memref.load %arg1[%c3] : memref<98xf32, #tpu.memory_space<smem>>
    %c52 = arith.constant 52 : index
    %124 = memref.load %arg1[%c52] : memref<98xf32, #tpu.memory_space<smem>>
    %125 = vector.broadcast %123 : f32 to vector<1x256xf32>
    %126 = arith.mulf %125, %121 : vector<1x256xf32>
    %127 = vector.broadcast %124 : f32 to vector<1x256xf32>
    %128 = arith.mulf %127, %122 : vector<1x256xf32>
    %129 = arith.addf %126, %128 : vector<1x256xf32>
    %130 = arith.andi %15, %50 : vector<1x256xi1>
    %cst_29 = arith.constant 0.000000e+00 : f32
    %131 = vector.broadcast %cst_29 : f32 to vector<1x256xf32>
    %132 = arith.select %130, %129, %131 : vector<1x256xi1>, vector<1x256xf32>
    %133 = arith.addf %120, %132 : vector<1x256xf32>
    %c47_i32 = arith.constant 47 : i32
    %134 = tpu.dynamic_rotate %3 by %c47_i32 dim 1 : vector<1x256xf32>, i32 -> vector<1x256xf32>
    %c47_i32_30 = arith.constant 47 : i32
    %135 = tpu.dynamic_rotate %7 by %c47_i32_30 dim 1 : vector<1x256xf32>, i32 -> vector<1x256xf32>
    %c4 = arith.constant 4 : index
    %136 = memref.load %arg1[%c4] : memref<98xf32, #tpu.memory_space<smem>>
    %c53 = arith.constant 53 : index
    %137 = memref.load %arg1[%c53] : memref<98xf32, #tpu.memory_space<smem>>
    %138 = vector.broadcast %136 : f32 to vector<1x256xf32>
    %139 = arith.mulf %138, %134 : vector<1x256xf32>
    %140 = vector.broadcast %137 : f32 to vector<1x256xf32>
    %141 = arith.mulf %140, %135 : vector<1x256xf32>
    %142 = arith.addf %139, %141 : vector<1x256xf32>
    %143 = arith.andi %15, %60 : vector<1x256xi1>
    %cst_31 = arith.constant 0.000000e+00 : f32
    %144 = vector.broadcast %cst_31 : f32 to vector<1x256xf32>
    %145 = arith.select %143, %142, %144 : vector<1x256xi1>, vector<1x256xf32>
    %146 = arith.addf %133, %145 : vector<1x256xf32>
    %c46_i32 = arith.constant 46 : i32
    %147 = tpu.dynamic_rotate %3 by %c46_i32 dim 1 : vector<1x256xf32>, i32 -> vector<1x256xf32>
    %c46_i32_32 = arith.constant 46 : i32
    %148 = tpu.dynamic_rotate %7 by %c46_i32_32 dim 1 : vector<1x256xf32>, i32 -> vector<1x256xf32>
    %c5 = arith.constant 5 : index
    %149 = memref.load %arg1[%c5] : memref<98xf32, #tpu.memory_space<smem>>
    %c54 = arith.constant 54 : index
    %150 = memref.load %arg1[%c54] : memref<98xf32, #tpu.memory_space<smem>>
    %151 = vector.broadcast %149 : f32 to vector<1x256xf32>
    %152 = arith.mulf %151, %147 : vector<1x256xf32>
    %153 = vector.broadcast %150 : f32 to vector<1x256xf32>
    %154 = arith.mulf %153, %148 : vector<1x256xf32>
    %155 = arith.addf %152, %154 : vector<1x256xf32>
    %156 = arith.andi %15, %70 : vector<1x256xi1>
    %cst_33 = arith.constant 0.000000e+00 : f32
    %157 = vector.broadcast %cst_33 : f32 to vector<1x256xf32>
    %158 = arith.select %156, %155, %157 : vector<1x256xi1>, vector<1x256xf32>
    %159 = arith.addf %146, %158 : vector<1x256xf32>
    %c45_i32 = arith.constant 45 : i32
    %160 = tpu.dynamic_rotate %3 by %c45_i32 dim 1 : vector<1x256xf32>, i32 -> vector<1x256xf32>
    %c45_i32_34 = arith.constant 45 : i32
    %161 = tpu.dynamic_rotate %7 by %c45_i32_34 dim 1 : vector<1x256xf32>, i32 -> vector<1x256xf32>
    %c6 = arith.constant 6 : index
    %162 = memref.load %arg1[%c6] : memref<98xf32, #tpu.memory_space<smem>>
    %c55 = arith.constant 55 : index
    %163 = memref.load %arg1[%c55] : memref<98xf32, #tpu.memory_space<smem>>
    %164 = vector.broadcast %162 : f32 to vector<1x256xf32>
    %165 = arith.mulf %164, %160 : vector<1x256xf32>
    %166 = vector.broadcast %163 : f32 to vector<1x256xf32>
    %167 = arith.mulf %166, %161 : vector<1x256xf32>
    %168 = arith.addf %165, %167 : vector<1x256xf32>
    %169 = arith.andi %15, %80 : vector<1x256xi1>
    %cst_35 = arith.constant 0.000000e+00 : f32
    %170 = vector.broadcast %cst_35 : f32 to vector<1x256xf32>
    %171 = arith.select %169, %168, %170 : vector<1x256xi1>, vector<1x256xf32>
    %172 = arith.addf %159, %171 : vector<1x256xf32>
    %c35_i32 = arith.constant 35 : i32
    %173 = tpu.dynamic_rotate %3 by %c35_i32 dim 1 : vector<1x256xf32>, i32 -> vector<1x256xf32>
    %c35_i32_36 = arith.constant 35 : i32
    %174 = tpu.dynamic_rotate %7 by %c35_i32_36 dim 1 : vector<1x256xf32>, i32 -> vector<1x256xf32>
    %c7 = arith.constant 7 : index
    %175 = memref.load %arg1[%c7] : memref<98xf32, #tpu.memory_space<smem>>
    %c56 = arith.constant 56 : index
    %176 = memref.load %arg1[%c56] : memref<98xf32, #tpu.memory_space<smem>>
    %177 = vector.broadcast %175 : f32 to vector<1x256xf32>
    %178 = arith.mulf %177, %173 : vector<1x256xf32>
    %179 = vector.broadcast %176 : f32 to vector<1x256xf32>
    %180 = arith.mulf %179, %174 : vector<1x256xf32>
    %181 = arith.addf %178, %180 : vector<1x256xf32>
    %182 = arith.andi %25, %20 : vector<1x256xi1>
    %cst_37 = arith.constant 0.000000e+00 : f32
    %183 = vector.broadcast %cst_37 : f32 to vector<1x256xf32>
    %184 = arith.select %182, %181, %183 : vector<1x256xi1>, vector<1x256xf32>
    %185 = arith.addf %172, %184 : vector<1x256xf32>
    %c34_i32 = arith.constant 34 : i32
    %186 = tpu.dynamic_rotate %3 by %c34_i32 dim 1 : vector<1x256xf32>, i32 -> vector<1x256xf32>
    %c34_i32_38 = arith.constant 34 : i32
    %187 = tpu.dynamic_rotate %7 by %c34_i32_38 dim 1 : vector<1x256xf32>, i32 -> vector<1x256xf32>
    %c8 = arith.constant 8 : index
    %188 = memref.load %arg1[%c8] : memref<98xf32, #tpu.memory_space<smem>>
    %c57 = arith.constant 57 : index
    %189 = memref.load %arg1[%c57] : memref<98xf32, #tpu.memory_space<smem>>
    %190 = vector.broadcast %188 : f32 to vector<1x256xf32>
    %191 = arith.mulf %190, %186 : vector<1x256xf32>
    %192 = vector.broadcast %189 : f32 to vector<1x256xf32>
    %193 = arith.mulf %192, %187 : vector<1x256xf32>
    %194 = arith.addf %191, %193 : vector<1x256xf32>
    %195 = arith.andi %25, %30 : vector<1x256xi1>
    %cst_39 = arith.constant 0.000000e+00 : f32
    %196 = vector.broadcast %cst_39 : f32 to vector<1x256xf32>
    %197 = arith.select %195, %194, %196 : vector<1x256xi1>, vector<1x256xf32>
    %198 = arith.addf %185, %197 : vector<1x256xf32>
    %c33_i32 = arith.constant 33 : i32
    %199 = tpu.dynamic_rotate %3 by %c33_i32 dim 1 : vector<1x256xf32>, i32 -> vector<1x256xf32>
    %c33_i32_40 = arith.constant 33 : i32
    %200 = tpu.dynamic_rotate %7 by %c33_i32_40 dim 1 : vector<1x256xf32>, i32 -> vector<1x256xf32>
    %c9 = arith.constant 9 : index
    %201 = memref.load %arg1[%c9] : memref<98xf32, #tpu.memory_space<smem>>
    %c58 = arith.constant 58 : index
    %202 = memref.load %arg1[%c58] : memref<98xf32, #tpu.memory_space<smem>>
    %203 = vector.broadcast %201 : f32 to vector<1x256xf32>
    %204 = arith.mulf %203, %199 : vector<1x256xf32>
    %205 = vector.broadcast %202 : f32 to vector<1x256xf32>
    %206 = arith.mulf %205, %200 : vector<1x256xf32>
    %207 = arith.addf %204, %206 : vector<1x256xf32>
    %208 = arith.andi %25, %40 : vector<1x256xi1>
    %cst_41 = arith.constant 0.000000e+00 : f32
    %209 = vector.broadcast %cst_41 : f32 to vector<1x256xf32>
    %210 = arith.select %208, %207, %209 : vector<1x256xi1>, vector<1x256xf32>
    %211 = arith.addf %198, %210 : vector<1x256xf32>
    %c32_i32 = arith.constant 32 : i32
    %212 = tpu.dynamic_rotate %3 by %c32_i32 dim 1 : vector<1x256xf32>, i32 -> vector<1x256xf32>
    %c32_i32_42 = arith.constant 32 : i32
    %213 = tpu.dynamic_rotate %7 by %c32_i32_42 dim 1 : vector<1x256xf32>, i32 -> vector<1x256xf32>
    %c10 = arith.constant 10 : index
    %214 = memref.load %arg1[%c10] : memref<98xf32, #tpu.memory_space<smem>>
    %c59 = arith.constant 59 : index
    %215 = memref.load %arg1[%c59] : memref<98xf32, #tpu.memory_space<smem>>
    %216 = vector.broadcast %214 : f32 to vector<1x256xf32>
    %217 = arith.mulf %216, %212 : vector<1x256xf32>
    %218 = vector.broadcast %215 : f32 to vector<1x256xf32>
    %219 = arith.mulf %218, %213 : vector<1x256xf32>
    %220 = arith.addf %217, %219 : vector<1x256xf32>
    %221 = arith.andi %25, %50 : vector<1x256xi1>
    %cst_43 = arith.constant 0.000000e+00 : f32
    %222 = vector.broadcast %cst_43 : f32 to vector<1x256xf32>
    %223 = arith.select %221, %220, %222 : vector<1x256xi1>, vector<1x256xf32>
    %224 = arith.addf %211, %223 : vector<1x256xf32>
    %c31_i32 = arith.constant 31 : i32
    %225 = tpu.dynamic_rotate %3 by %c31_i32 dim 1 : vector<1x256xf32>, i32 -> vector<1x256xf32>
    %c31_i32_44 = arith.constant 31 : i32
    %226 = tpu.dynamic_rotate %7 by %c31_i32_44 dim 1 : vector<1x256xf32>, i32 -> vector<1x256xf32>
    %c11 = arith.constant 11 : index
    %227 = memref.load %arg1[%c11] : memref<98xf32, #tpu.memory_space<smem>>
    %c60 = arith.constant 60 : index
    %228 = memref.load %arg1[%c60] : memref<98xf32, #tpu.memory_space<smem>>
    %229 = vector.broadcast %227 : f32 to vector<1x256xf32>
    %230 = arith.mulf %229, %225 : vector<1x256xf32>
    %231 = vector.broadcast %228 : f32 to vector<1x256xf32>
    %232 = arith.mulf %231, %226 : vector<1x256xf32>
    %233 = arith.addf %230, %232 : vector<1x256xf32>
    %234 = arith.andi %25, %60 : vector<1x256xi1>
    %cst_45 = arith.constant 0.000000e+00 : f32
    %235 = vector.broadcast %cst_45 : f32 to vector<1x256xf32>
    %236 = arith.select %234, %233, %235 : vector<1x256xi1>, vector<1x256xf32>
    %237 = arith.addf %224, %236 : vector<1x256xf32>
    %c30_i32 = arith.constant 30 : i32
    %238 = tpu.dynamic_rotate %3 by %c30_i32 dim 1 : vector<1x256xf32>, i32 -> vector<1x256xf32>
    %c30_i32_46 = arith.constant 30 : i32
    %239 = tpu.dynamic_rotate %7 by %c30_i32_46 dim 1 : vector<1x256xf32>, i32 -> vector<1x256xf32>
    %c12 = arith.constant 12 : index
    %240 = memref.load %arg1[%c12] : memref<98xf32, #tpu.memory_space<smem>>
    %c61 = arith.constant 61 : index
    %241 = memref.load %arg1[%c61] : memref<98xf32, #tpu.memory_space<smem>>
    %242 = vector.broadcast %240 : f32 to vector<1x256xf32>
    %243 = arith.mulf %242, %238 : vector<1x256xf32>
    %244 = vector.broadcast %241 : f32 to vector<1x256xf32>
    %245 = arith.mulf %244, %239 : vector<1x256xf32>
    %246 = arith.addf %243, %245 : vector<1x256xf32>
    %247 = arith.andi %25, %70 : vector<1x256xi1>
    %cst_47 = arith.constant 0.000000e+00 : f32
    %248 = vector.broadcast %cst_47 : f32 to vector<1x256xf32>
    %249 = arith.select %247, %246, %248 : vector<1x256xi1>, vector<1x256xf32>
    %250 = arith.addf %237, %249 : vector<1x256xf32>
    %c29_i32 = arith.constant 29 : i32
    %251 = tpu.dynamic_rotate %3 by %c29_i32 dim 1 : vector<1x256xf32>, i32 -> vector<1x256xf32>
    %c29_i32_48 = arith.constant 29 : i32
    %252 = tpu.dynamic_rotate %7 by %c29_i32_48 dim 1 : vector<1x256xf32>, i32 -> vector<1x256xf32>
    %c13 = arith.constant 13 : index
    %253 = memref.load %arg1[%c13] : memref<98xf32, #tpu.memory_space<smem>>
    %c62 = arith.constant 62 : index
    %254 = memref.load %arg1[%c62] : memref<98xf32, #tpu.memory_space<smem>>
    %255 = vector.broadcast %253 : f32 to vector<1x256xf32>
    %256 = arith.mulf %255, %251 : vector<1x256xf32>
    %257 = vector.broadcast %254 : f32 to vector<1x256xf32>
    %258 = arith.mulf %257, %252 : vector<1x256xf32>
    %259 = arith.addf %256, %258 : vector<1x256xf32>
    %260 = arith.andi %25, %80 : vector<1x256xi1>
    %cst_49 = arith.constant 0.000000e+00 : f32
    %261 = vector.broadcast %cst_49 : f32 to vector<1x256xf32>
    %262 = arith.select %260, %259, %261 : vector<1x256xi1>, vector<1x256xf32>
    %263 = arith.addf %250, %262 : vector<1x256xf32>
    %c19_i32_50 = arith.constant 19 : i32
    %264 = tpu.dynamic_rotate %3 by %c19_i32_50 dim 1 : vector<1x256xf32>, i32 -> vector<1x256xf32>
    %c19_i32_51 = arith.constant 19 : i32
    %265 = tpu.dynamic_rotate %7 by %c19_i32_51 dim 1 : vector<1x256xf32>, i32 -> vector<1x256xf32>
    %c14 = arith.constant 14 : index
    %266 = memref.load %arg1[%c14] : memref<98xf32, #tpu.memory_space<smem>>
    %c63 = arith.constant 63 : index
    %267 = memref.load %arg1[%c63] : memref<98xf32, #tpu.memory_space<smem>>
    %268 = vector.broadcast %266 : f32 to vector<1x256xf32>
    %269 = arith.mulf %268, %264 : vector<1x256xf32>
    %270 = vector.broadcast %267 : f32 to vector<1x256xf32>
    %271 = arith.mulf %270, %265 : vector<1x256xf32>
    %272 = arith.addf %269, %271 : vector<1x256xf32>
    %273 = arith.andi %35, %20 : vector<1x256xi1>
    %cst_52 = arith.constant 0.000000e+00 : f32
    %274 = vector.broadcast %cst_52 : f32 to vector<1x256xf32>
    %275 = arith.select %273, %272, %274 : vector<1x256xi1>, vector<1x256xf32>
    %276 = arith.addf %263, %275 : vector<1x256xf32>
    %c18_i32_53 = arith.constant 18 : i32
    %277 = tpu.dynamic_rotate %3 by %c18_i32_53 dim 1 : vector<1x256xf32>, i32 -> vector<1x256xf32>
    %c18_i32_54 = arith.constant 18 : i32
    %278 = tpu.dynamic_rotate %7 by %c18_i32_54 dim 1 : vector<1x256xf32>, i32 -> vector<1x256xf32>
    %c15 = arith.constant 15 : index
    %279 = memref.load %arg1[%c15] : memref<98xf32, #tpu.memory_space<smem>>
    %c64 = arith.constant 64 : index
    %280 = memref.load %arg1[%c64] : memref<98xf32, #tpu.memory_space<smem>>
    %281 = vector.broadcast %279 : f32 to vector<1x256xf32>
    %282 = arith.mulf %281, %277 : vector<1x256xf32>
    %283 = vector.broadcast %280 : f32 to vector<1x256xf32>
    %284 = arith.mulf %283, %278 : vector<1x256xf32>
    %285 = arith.addf %282, %284 : vector<1x256xf32>
    %286 = arith.andi %35, %30 : vector<1x256xi1>
    %cst_55 = arith.constant 0.000000e+00 : f32
    %287 = vector.broadcast %cst_55 : f32 to vector<1x256xf32>
    %288 = arith.select %286, %285, %287 : vector<1x256xi1>, vector<1x256xf32>
    %289 = arith.addf %276, %288 : vector<1x256xf32>
    %c17_i32_56 = arith.constant 17 : i32
    %290 = tpu.dynamic_rotate %3 by %c17_i32_56 dim 1 : vector<1x256xf32>, i32 -> vector<1x256xf32>
    %c17_i32_57 = arith.constant 17 : i32
    %291 = tpu.dynamic_rotate %7 by %c17_i32_57 dim 1 : vector<1x256xf32>, i32 -> vector<1x256xf32>
    %c16 = arith.constant 16 : index
    %292 = memref.load %arg1[%c16] : memref<98xf32, #tpu.memory_space<smem>>
    %c65 = arith.constant 65 : index
    %293 = memref.load %arg1[%c65] : memref<98xf32, #tpu.memory_space<smem>>
    %294 = vector.broadcast %292 : f32 to vector<1x256xf32>
    %295 = arith.mulf %294, %290 : vector<1x256xf32>
    %296 = vector.broadcast %293 : f32 to vector<1x256xf32>
    %297 = arith.mulf %296, %291 : vector<1x256xf32>
    %298 = arith.addf %295, %297 : vector<1x256xf32>
    %299 = arith.andi %35, %40 : vector<1x256xi1>
    %cst_58 = arith.constant 0.000000e+00 : f32
    %300 = vector.broadcast %cst_58 : f32 to vector<1x256xf32>
    %301 = arith.select %299, %298, %300 : vector<1x256xi1>, vector<1x256xf32>
    %302 = arith.addf %289, %301 : vector<1x256xf32>
    %c16_i32_59 = arith.constant 16 : i32
    %303 = tpu.dynamic_rotate %3 by %c16_i32_59 dim 1 : vector<1x256xf32>, i32 -> vector<1x256xf32>
    %c16_i32_60 = arith.constant 16 : i32
    %304 = tpu.dynamic_rotate %7 by %c16_i32_60 dim 1 : vector<1x256xf32>, i32 -> vector<1x256xf32>
    %c17 = arith.constant 17 : index
    %305 = memref.load %arg1[%c17] : memref<98xf32, #tpu.memory_space<smem>>
    %c66 = arith.constant 66 : index
    %306 = memref.load %arg1[%c66] : memref<98xf32, #tpu.memory_space<smem>>
    %307 = vector.broadcast %305 : f32 to vector<1x256xf32>
    %308 = arith.mulf %307, %303 : vector<1x256xf32>
    %309 = vector.broadcast %306 : f32 to vector<1x256xf32>
    %310 = arith.mulf %309, %304 : vector<1x256xf32>
    %311 = arith.addf %308, %310 : vector<1x256xf32>
    %312 = arith.andi %35, %50 : vector<1x256xi1>
    %cst_61 = arith.constant 0.000000e+00 : f32
    %313 = vector.broadcast %cst_61 : f32 to vector<1x256xf32>
    %314 = arith.select %312, %311, %313 : vector<1x256xi1>, vector<1x256xf32>
    %315 = arith.addf %302, %314 : vector<1x256xf32>
    %c15_i32_62 = arith.constant 15 : i32
    %316 = tpu.dynamic_rotate %3 by %c15_i32_62 dim 1 : vector<1x256xf32>, i32 -> vector<1x256xf32>
    %c15_i32_63 = arith.constant 15 : i32
    %317 = tpu.dynamic_rotate %7 by %c15_i32_63 dim 1 : vector<1x256xf32>, i32 -> vector<1x256xf32>
    %c18 = arith.constant 18 : index
    %318 = memref.load %arg1[%c18] : memref<98xf32, #tpu.memory_space<smem>>
    %c67 = arith.constant 67 : index
    %319 = memref.load %arg1[%c67] : memref<98xf32, #tpu.memory_space<smem>>
    %320 = vector.broadcast %318 : f32 to vector<1x256xf32>
    %321 = arith.mulf %320, %316 : vector<1x256xf32>
    %322 = vector.broadcast %319 : f32 to vector<1x256xf32>
    %323 = arith.mulf %322, %317 : vector<1x256xf32>
    %324 = arith.addf %321, %323 : vector<1x256xf32>
    %325 = arith.andi %35, %60 : vector<1x256xi1>
    %cst_64 = arith.constant 0.000000e+00 : f32
    %326 = vector.broadcast %cst_64 : f32 to vector<1x256xf32>
    %327 = arith.select %325, %324, %326 : vector<1x256xi1>, vector<1x256xf32>
    %328 = arith.addf %315, %327 : vector<1x256xf32>
    %c14_i32_65 = arith.constant 14 : i32
    %329 = tpu.dynamic_rotate %3 by %c14_i32_65 dim 1 : vector<1x256xf32>, i32 -> vector<1x256xf32>
    %c14_i32_66 = arith.constant 14 : i32
    %330 = tpu.dynamic_rotate %7 by %c14_i32_66 dim 1 : vector<1x256xf32>, i32 -> vector<1x256xf32>
    %c19 = arith.constant 19 : index
    %331 = memref.load %arg1[%c19] : memref<98xf32, #tpu.memory_space<smem>>
    %c68 = arith.constant 68 : index
    %332 = memref.load %arg1[%c68] : memref<98xf32, #tpu.memory_space<smem>>
    %333 = vector.broadcast %331 : f32 to vector<1x256xf32>
    %334 = arith.mulf %333, %329 : vector<1x256xf32>
    %335 = vector.broadcast %332 : f32 to vector<1x256xf32>
    %336 = arith.mulf %335, %330 : vector<1x256xf32>
    %337 = arith.addf %334, %336 : vector<1x256xf32>
    %338 = arith.andi %35, %70 : vector<1x256xi1>
    %cst_67 = arith.constant 0.000000e+00 : f32
    %339 = vector.broadcast %cst_67 : f32 to vector<1x256xf32>
    %340 = arith.select %338, %337, %339 : vector<1x256xi1>, vector<1x256xf32>
    %341 = arith.addf %328, %340 : vector<1x256xf32>
    %c13_i32_68 = arith.constant 13 : i32
    %342 = tpu.dynamic_rotate %3 by %c13_i32_68 dim 1 : vector<1x256xf32>, i32 -> vector<1x256xf32>
    %c13_i32_69 = arith.constant 13 : i32
    %343 = tpu.dynamic_rotate %7 by %c13_i32_69 dim 1 : vector<1x256xf32>, i32 -> vector<1x256xf32>
    %c20 = arith.constant 20 : index
    %344 = memref.load %arg1[%c20] : memref<98xf32, #tpu.memory_space<smem>>
    %c69 = arith.constant 69 : index
    %345 = memref.load %arg1[%c69] : memref<98xf32, #tpu.memory_space<smem>>
    %346 = vector.broadcast %344 : f32 to vector<1x256xf32>
    %347 = arith.mulf %346, %342 : vector<1x256xf32>
    %348 = vector.broadcast %345 : f32 to vector<1x256xf32>
    %349 = arith.mulf %348, %343 : vector<1x256xf32>
    %350 = arith.addf %347, %349 : vector<1x256xf32>
    %351 = arith.andi %35, %80 : vector<1x256xi1>
    %cst_70 = arith.constant 0.000000e+00 : f32
    %352 = vector.broadcast %cst_70 : f32 to vector<1x256xf32>
    %353 = arith.select %351, %350, %352 : vector<1x256xi1>, vector<1x256xf32>
    %354 = arith.addf %341, %353 : vector<1x256xf32>
    %c3_i32_71 = arith.constant 3 : i32
    %355 = tpu.dynamic_rotate %3 by %c3_i32_71 dim 1 : vector<1x256xf32>, i32 -> vector<1x256xf32>
    %c3_i32_72 = arith.constant 3 : i32
    %356 = tpu.dynamic_rotate %7 by %c3_i32_72 dim 1 : vector<1x256xf32>, i32 -> vector<1x256xf32>
    %c21 = arith.constant 21 : index
    %357 = memref.load %arg1[%c21] : memref<98xf32, #tpu.memory_space<smem>>
    %c70 = arith.constant 70 : index
    %358 = memref.load %arg1[%c70] : memref<98xf32, #tpu.memory_space<smem>>
    %359 = vector.broadcast %357 : f32 to vector<1x256xf32>
    %360 = arith.mulf %359, %355 : vector<1x256xf32>
    %361 = vector.broadcast %358 : f32 to vector<1x256xf32>
    %362 = arith.mulf %361, %356 : vector<1x256xf32>
    %363 = arith.addf %360, %362 : vector<1x256xf32>
    %364 = arith.andi %45, %20 : vector<1x256xi1>
    %cst_73 = arith.constant 0.000000e+00 : f32
    %365 = vector.broadcast %cst_73 : f32 to vector<1x256xf32>
    %366 = arith.select %364, %363, %365 : vector<1x256xi1>, vector<1x256xf32>
    %367 = arith.addf %354, %366 : vector<1x256xf32>
    %c2_i32_74 = arith.constant 2 : i32
    %368 = tpu.dynamic_rotate %3 by %c2_i32_74 dim 1 : vector<1x256xf32>, i32 -> vector<1x256xf32>
    %c2_i32_75 = arith.constant 2 : i32
    %369 = tpu.dynamic_rotate %7 by %c2_i32_75 dim 1 : vector<1x256xf32>, i32 -> vector<1x256xf32>
    %c22 = arith.constant 22 : index
    %370 = memref.load %arg1[%c22] : memref<98xf32, #tpu.memory_space<smem>>
    %c71 = arith.constant 71 : index
    %371 = memref.load %arg1[%c71] : memref<98xf32, #tpu.memory_space<smem>>
    %372 = vector.broadcast %370 : f32 to vector<1x256xf32>
    %373 = arith.mulf %372, %368 : vector<1x256xf32>
    %374 = vector.broadcast %371 : f32 to vector<1x256xf32>
    %375 = arith.mulf %374, %369 : vector<1x256xf32>
    %376 = arith.addf %373, %375 : vector<1x256xf32>
    %377 = arith.andi %45, %30 : vector<1x256xi1>
    %cst_76 = arith.constant 0.000000e+00 : f32
    %378 = vector.broadcast %cst_76 : f32 to vector<1x256xf32>
    %379 = arith.select %377, %376, %378 : vector<1x256xi1>, vector<1x256xf32>
    %380 = arith.addf %367, %379 : vector<1x256xf32>
    %c1_i32_77 = arith.constant 1 : i32
    %381 = tpu.dynamic_rotate %3 by %c1_i32_77 dim 1 : vector<1x256xf32>, i32 -> vector<1x256xf32>
    %c1_i32_78 = arith.constant 1 : i32
    %382 = tpu.dynamic_rotate %7 by %c1_i32_78 dim 1 : vector<1x256xf32>, i32 -> vector<1x256xf32>
    %c23 = arith.constant 23 : index
    %383 = memref.load %arg1[%c23] : memref<98xf32, #tpu.memory_space<smem>>
    %c72 = arith.constant 72 : index
    %384 = memref.load %arg1[%c72] : memref<98xf32, #tpu.memory_space<smem>>
    %385 = vector.broadcast %383 : f32 to vector<1x256xf32>
    %386 = arith.mulf %385, %381 : vector<1x256xf32>
    %387 = vector.broadcast %384 : f32 to vector<1x256xf32>
    %388 = arith.mulf %387, %382 : vector<1x256xf32>
    %389 = arith.addf %386, %388 : vector<1x256xf32>
    %390 = arith.andi %45, %40 : vector<1x256xi1>
    %cst_79 = arith.constant 0.000000e+00 : f32
    %391 = vector.broadcast %cst_79 : f32 to vector<1x256xf32>
    %392 = arith.select %390, %389, %391 : vector<1x256xi1>, vector<1x256xf32>
    %393 = arith.addf %380, %392 : vector<1x256xf32>
    %c24 = arith.constant 24 : index
    %394 = memref.load %arg1[%c24] : memref<98xf32, #tpu.memory_space<smem>>
    %c73 = arith.constant 73 : index
    %395 = memref.load %arg1[%c73] : memref<98xf32, #tpu.memory_space<smem>>
    %396 = vector.broadcast %394 : f32 to vector<1x256xf32>
    %397 = arith.mulf %396, %3 : vector<1x256xf32>
    %398 = vector.broadcast %395 : f32 to vector<1x256xf32>
    %399 = arith.mulf %398, %7 : vector<1x256xf32>
    %400 = arith.addf %397, %399 : vector<1x256xf32>
    %401 = arith.andi %45, %50 : vector<1x256xi1>
    %cst_80 = arith.constant 0.000000e+00 : f32
    %402 = vector.broadcast %cst_80 : f32 to vector<1x256xf32>
    %403 = arith.select %401, %400, %402 : vector<1x256xi1>, vector<1x256xf32>
    %404 = arith.addf %393, %403 : vector<1x256xf32>
    %c255_i32 = arith.constant 255 : i32
    %405 = tpu.dynamic_rotate %3 by %c255_i32 dim 1 : vector<1x256xf32>, i32 -> vector<1x256xf32>
    %c255_i32_81 = arith.constant 255 : i32
    %406 = tpu.dynamic_rotate %7 by %c255_i32_81 dim 1 : vector<1x256xf32>, i32 -> vector<1x256xf32>
    %c25 = arith.constant 25 : index
    %407 = memref.load %arg1[%c25] : memref<98xf32, #tpu.memory_space<smem>>
    %c74 = arith.constant 74 : index
    %408 = memref.load %arg1[%c74] : memref<98xf32, #tpu.memory_space<smem>>
    %409 = vector.broadcast %407 : f32 to vector<1x256xf32>
    %410 = arith.mulf %409, %405 : vector<1x256xf32>
    %411 = vector.broadcast %408 : f32 to vector<1x256xf32>
    %412 = arith.mulf %411, %406 : vector<1x256xf32>
    %413 = arith.addf %410, %412 : vector<1x256xf32>
    %414 = arith.andi %45, %60 : vector<1x256xi1>
    %cst_82 = arith.constant 0.000000e+00 : f32
    %415 = vector.broadcast %cst_82 : f32 to vector<1x256xf32>
    %416 = arith.select %414, %413, %415 : vector<1x256xi1>, vector<1x256xf32>
    %417 = arith.addf %404, %416 : vector<1x256xf32>
    %c254_i32 = arith.constant 254 : i32
    %418 = tpu.dynamic_rotate %3 by %c254_i32 dim 1 : vector<1x256xf32>, i32 -> vector<1x256xf32>
    %c254_i32_83 = arith.constant 254 : i32
    %419 = tpu.dynamic_rotate %7 by %c254_i32_83 dim 1 : vector<1x256xf32>, i32 -> vector<1x256xf32>
    %c26 = arith.constant 26 : index
    %420 = memref.load %arg1[%c26] : memref<98xf32, #tpu.memory_space<smem>>
    %c75 = arith.constant 75 : index
    %421 = memref.load %arg1[%c75] : memref<98xf32, #tpu.memory_space<smem>>
    %422 = vector.broadcast %420 : f32 to vector<1x256xf32>
    %423 = arith.mulf %422, %418 : vector<1x256xf32>
    %424 = vector.broadcast %421 : f32 to vector<1x256xf32>
    %425 = arith.mulf %424, %419 : vector<1x256xf32>
    %426 = arith.addf %423, %425 : vector<1x256xf32>
    %427 = arith.andi %45, %70 : vector<1x256xi1>
    %cst_84 = arith.constant 0.000000e+00 : f32
    %428 = vector.broadcast %cst_84 : f32 to vector<1x256xf32>
    %429 = arith.select %427, %426, %428 : vector<1x256xi1>, vector<1x256xf32>
    %430 = arith.addf %417, %429 : vector<1x256xf32>
    %c253_i32 = arith.constant 253 : i32
    %431 = tpu.dynamic_rotate %3 by %c253_i32 dim 1 : vector<1x256xf32>, i32 -> vector<1x256xf32>
    %c253_i32_85 = arith.constant 253 : i32
    %432 = tpu.dynamic_rotate %7 by %c253_i32_85 dim 1 : vector<1x256xf32>, i32 -> vector<1x256xf32>
    %c27 = arith.constant 27 : index
    %433 = memref.load %arg1[%c27] : memref<98xf32, #tpu.memory_space<smem>>
    %c76 = arith.constant 76 : index
    %434 = memref.load %arg1[%c76] : memref<98xf32, #tpu.memory_space<smem>>
    %435 = vector.broadcast %433 : f32 to vector<1x256xf32>
    %436 = arith.mulf %435, %431 : vector<1x256xf32>
    %437 = vector.broadcast %434 : f32 to vector<1x256xf32>
    %438 = arith.mulf %437, %432 : vector<1x256xf32>
    %439 = arith.addf %436, %438 : vector<1x256xf32>
    %440 = arith.andi %45, %80 : vector<1x256xi1>
    %cst_86 = arith.constant 0.000000e+00 : f32
    %441 = vector.broadcast %cst_86 : f32 to vector<1x256xf32>
    %442 = arith.select %440, %439, %441 : vector<1x256xi1>, vector<1x256xf32>
    %443 = arith.addf %430, %442 : vector<1x256xf32>
    %c243_i32 = arith.constant 243 : i32
    %444 = tpu.dynamic_rotate %3 by %c243_i32 dim 1 : vector<1x256xf32>, i32 -> vector<1x256xf32>
    %c243_i32_87 = arith.constant 243 : i32
    %445 = tpu.dynamic_rotate %7 by %c243_i32_87 dim 1 : vector<1x256xf32>, i32 -> vector<1x256xf32>
    %c28 = arith.constant 28 : index
    %446 = memref.load %arg1[%c28] : memref<98xf32, #tpu.memory_space<smem>>
    %c77 = arith.constant 77 : index
    %447 = memref.load %arg1[%c77] : memref<98xf32, #tpu.memory_space<smem>>
    %448 = vector.broadcast %446 : f32 to vector<1x256xf32>
    %449 = arith.mulf %448, %444 : vector<1x256xf32>
    %450 = vector.broadcast %447 : f32 to vector<1x256xf32>
    %451 = arith.mulf %450, %445 : vector<1x256xf32>
    %452 = arith.addf %449, %451 : vector<1x256xf32>
    %453 = arith.andi %55, %20 : vector<1x256xi1>
    %cst_88 = arith.constant 0.000000e+00 : f32
    %454 = vector.broadcast %cst_88 : f32 to vector<1x256xf32>
    %455 = arith.select %453, %452, %454 : vector<1x256xi1>, vector<1x256xf32>
    %456 = arith.addf %443, %455 : vector<1x256xf32>
    %c242_i32 = arith.constant 242 : i32
    %457 = tpu.dynamic_rotate %3 by %c242_i32 dim 1 : vector<1x256xf32>, i32 -> vector<1x256xf32>
    %c242_i32_89 = arith.constant 242 : i32
    %458 = tpu.dynamic_rotate %7 by %c242_i32_89 dim 1 : vector<1x256xf32>, i32 -> vector<1x256xf32>
    %c29 = arith.constant 29 : index
    %459 = memref.load %arg1[%c29] : memref<98xf32, #tpu.memory_space<smem>>
    %c78 = arith.constant 78 : index
    %460 = memref.load %arg1[%c78] : memref<98xf32, #tpu.memory_space<smem>>
    %461 = vector.broadcast %459 : f32 to vector<1x256xf32>
    %462 = arith.mulf %461, %457 : vector<1x256xf32>
    %463 = vector.broadcast %460 : f32 to vector<1x256xf32>
    %464 = arith.mulf %463, %458 : vector<1x256xf32>
    %465 = arith.addf %462, %464 : vector<1x256xf32>
    %466 = arith.andi %55, %30 : vector<1x256xi1>
    %cst_90 = arith.constant 0.000000e+00 : f32
    %467 = vector.broadcast %cst_90 : f32 to vector<1x256xf32>
    %468 = arith.select %466, %465, %467 : vector<1x256xi1>, vector<1x256xf32>
    %469 = arith.addf %456, %468 : vector<1x256xf32>
    %c241_i32 = arith.constant 241 : i32
    %470 = tpu.dynamic_rotate %3 by %c241_i32 dim 1 : vector<1x256xf32>, i32 -> vector<1x256xf32>
    %c241_i32_91 = arith.constant 241 : i32
    %471 = tpu.dynamic_rotate %7 by %c241_i32_91 dim 1 : vector<1x256xf32>, i32 -> vector<1x256xf32>
    %c30 = arith.constant 30 : index
    %472 = memref.load %arg1[%c30] : memref<98xf32, #tpu.memory_space<smem>>
    %c79 = arith.constant 79 : index
    %473 = memref.load %arg1[%c79] : memref<98xf32, #tpu.memory_space<smem>>
    %474 = vector.broadcast %472 : f32 to vector<1x256xf32>
    %475 = arith.mulf %474, %470 : vector<1x256xf32>
    %476 = vector.broadcast %473 : f32 to vector<1x256xf32>
    %477 = arith.mulf %476, %471 : vector<1x256xf32>
    %478 = arith.addf %475, %477 : vector<1x256xf32>
    %479 = arith.andi %55, %40 : vector<1x256xi1>
    %cst_92 = arith.constant 0.000000e+00 : f32
    %480 = vector.broadcast %cst_92 : f32 to vector<1x256xf32>
    %481 = arith.select %479, %478, %480 : vector<1x256xi1>, vector<1x256xf32>
    %482 = arith.addf %469, %481 : vector<1x256xf32>
    %c240_i32 = arith.constant 240 : i32
    %483 = tpu.dynamic_rotate %3 by %c240_i32 dim 1 : vector<1x256xf32>, i32 -> vector<1x256xf32>
    %c240_i32_93 = arith.constant 240 : i32
    %484 = tpu.dynamic_rotate %7 by %c240_i32_93 dim 1 : vector<1x256xf32>, i32 -> vector<1x256xf32>
    %c31 = arith.constant 31 : index
    %485 = memref.load %arg1[%c31] : memref<98xf32, #tpu.memory_space<smem>>
    %c80 = arith.constant 80 : index
    %486 = memref.load %arg1[%c80] : memref<98xf32, #tpu.memory_space<smem>>
    %487 = vector.broadcast %485 : f32 to vector<1x256xf32>
    %488 = arith.mulf %487, %483 : vector<1x256xf32>
    %489 = vector.broadcast %486 : f32 to vector<1x256xf32>
    %490 = arith.mulf %489, %484 : vector<1x256xf32>
    %491 = arith.addf %488, %490 : vector<1x256xf32>
    %492 = arith.andi %55, %50 : vector<1x256xi1>
    %cst_94 = arith.constant 0.000000e+00 : f32
    %493 = vector.broadcast %cst_94 : f32 to vector<1x256xf32>
    %494 = arith.select %492, %491, %493 : vector<1x256xi1>, vector<1x256xf32>
    %495 = arith.addf %482, %494 : vector<1x256xf32>
    %c239_i32 = arith.constant 239 : i32
    %496 = tpu.dynamic_rotate %3 by %c239_i32 dim 1 : vector<1x256xf32>, i32 -> vector<1x256xf32>
    %c239_i32_95 = arith.constant 239 : i32
    %497 = tpu.dynamic_rotate %7 by %c239_i32_95 dim 1 : vector<1x256xf32>, i32 -> vector<1x256xf32>
    %c32 = arith.constant 32 : index
    %498 = memref.load %arg1[%c32] : memref<98xf32, #tpu.memory_space<smem>>
    %c81 = arith.constant 81 : index
    %499 = memref.load %arg1[%c81] : memref<98xf32, #tpu.memory_space<smem>>
    %500 = vector.broadcast %498 : f32 to vector<1x256xf32>
    %501 = arith.mulf %500, %496 : vector<1x256xf32>
    %502 = vector.broadcast %499 : f32 to vector<1x256xf32>
    %503 = arith.mulf %502, %497 : vector<1x256xf32>
    %504 = arith.addf %501, %503 : vector<1x256xf32>
    %505 = arith.andi %55, %60 : vector<1x256xi1>
    %cst_96 = arith.constant 0.000000e+00 : f32
    %506 = vector.broadcast %cst_96 : f32 to vector<1x256xf32>
    %507 = arith.select %505, %504, %506 : vector<1x256xi1>, vector<1x256xf32>
    %508 = arith.addf %495, %507 : vector<1x256xf32>
    %c238_i32 = arith.constant 238 : i32
    %509 = tpu.dynamic_rotate %3 by %c238_i32 dim 1 : vector<1x256xf32>, i32 -> vector<1x256xf32>
    %c238_i32_97 = arith.constant 238 : i32
    %510 = tpu.dynamic_rotate %7 by %c238_i32_97 dim 1 : vector<1x256xf32>, i32 -> vector<1x256xf32>
    %c33 = arith.constant 33 : index
    %511 = memref.load %arg1[%c33] : memref<98xf32, #tpu.memory_space<smem>>
    %c82 = arith.constant 82 : index
    %512 = memref.load %arg1[%c82] : memref<98xf32, #tpu.memory_space<smem>>
    %513 = vector.broadcast %511 : f32 to vector<1x256xf32>
    %514 = arith.mulf %513, %509 : vector<1x256xf32>
    %515 = vector.broadcast %512 : f32 to vector<1x256xf32>
    %516 = arith.mulf %515, %510 : vector<1x256xf32>
    %517 = arith.addf %514, %516 : vector<1x256xf32>
    %518 = arith.andi %55, %70 : vector<1x256xi1>
    %cst_98 = arith.constant 0.000000e+00 : f32
    %519 = vector.broadcast %cst_98 : f32 to vector<1x256xf32>
    %520 = arith.select %518, %517, %519 : vector<1x256xi1>, vector<1x256xf32>
    %521 = arith.addf %508, %520 : vector<1x256xf32>
    %c237_i32 = arith.constant 237 : i32
    %522 = tpu.dynamic_rotate %3 by %c237_i32 dim 1 : vector<1x256xf32>, i32 -> vector<1x256xf32>
    %c237_i32_99 = arith.constant 237 : i32
    %523 = tpu.dynamic_rotate %7 by %c237_i32_99 dim 1 : vector<1x256xf32>, i32 -> vector<1x256xf32>
    %c34 = arith.constant 34 : index
    %524 = memref.load %arg1[%c34] : memref<98xf32, #tpu.memory_space<smem>>
    %c83 = arith.constant 83 : index
    %525 = memref.load %arg1[%c83] : memref<98xf32, #tpu.memory_space<smem>>
    %526 = vector.broadcast %524 : f32 to vector<1x256xf32>
    %527 = arith.mulf %526, %522 : vector<1x256xf32>
    %528 = vector.broadcast %525 : f32 to vector<1x256xf32>
    %529 = arith.mulf %528, %523 : vector<1x256xf32>
    %530 = arith.addf %527, %529 : vector<1x256xf32>
    %531 = arith.andi %55, %80 : vector<1x256xi1>
    %cst_100 = arith.constant 0.000000e+00 : f32
    %532 = vector.broadcast %cst_100 : f32 to vector<1x256xf32>
    %533 = arith.select %531, %530, %532 : vector<1x256xi1>, vector<1x256xf32>
    %534 = arith.addf %521, %533 : vector<1x256xf32>
    %c227_i32 = arith.constant 227 : i32
    %535 = tpu.dynamic_rotate %3 by %c227_i32 dim 1 : vector<1x256xf32>, i32 -> vector<1x256xf32>
    %c227_i32_101 = arith.constant 227 : i32
    %536 = tpu.dynamic_rotate %7 by %c227_i32_101 dim 1 : vector<1x256xf32>, i32 -> vector<1x256xf32>
    %c35 = arith.constant 35 : index
    %537 = memref.load %arg1[%c35] : memref<98xf32, #tpu.memory_space<smem>>
    %c84 = arith.constant 84 : index
    %538 = memref.load %arg1[%c84] : memref<98xf32, #tpu.memory_space<smem>>
    %539 = vector.broadcast %537 : f32 to vector<1x256xf32>
    %540 = arith.mulf %539, %535 : vector<1x256xf32>
    %541 = vector.broadcast %538 : f32 to vector<1x256xf32>
    %542 = arith.mulf %541, %536 : vector<1x256xf32>
    %543 = arith.addf %540, %542 : vector<1x256xf32>
    %544 = arith.andi %65, %20 : vector<1x256xi1>
    %cst_102 = arith.constant 0.000000e+00 : f32
    %545 = vector.broadcast %cst_102 : f32 to vector<1x256xf32>
    %546 = arith.select %544, %543, %545 : vector<1x256xi1>, vector<1x256xf32>
    %547 = arith.addf %534, %546 : vector<1x256xf32>
    %c226_i32 = arith.constant 226 : i32
    %548 = tpu.dynamic_rotate %3 by %c226_i32 dim 1 : vector<1x256xf32>, i32 -> vector<1x256xf32>
    %c226_i32_103 = arith.constant 226 : i32
    %549 = tpu.dynamic_rotate %7 by %c226_i32_103 dim 1 : vector<1x256xf32>, i32 -> vector<1x256xf32>
    %c36 = arith.constant 36 : index
    %550 = memref.load %arg1[%c36] : memref<98xf32, #tpu.memory_space<smem>>
    %c85 = arith.constant 85 : index
    %551 = memref.load %arg1[%c85] : memref<98xf32, #tpu.memory_space<smem>>
    %552 = vector.broadcast %550 : f32 to vector<1x256xf32>
    %553 = arith.mulf %552, %548 : vector<1x256xf32>
    %554 = vector.broadcast %551 : f32 to vector<1x256xf32>
    %555 = arith.mulf %554, %549 : vector<1x256xf32>
    %556 = arith.addf %553, %555 : vector<1x256xf32>
    %557 = arith.andi %65, %30 : vector<1x256xi1>
    %cst_104 = arith.constant 0.000000e+00 : f32
    %558 = vector.broadcast %cst_104 : f32 to vector<1x256xf32>
    %559 = arith.select %557, %556, %558 : vector<1x256xi1>, vector<1x256xf32>
    %560 = arith.addf %547, %559 : vector<1x256xf32>
    %c225_i32 = arith.constant 225 : i32
    %561 = tpu.dynamic_rotate %3 by %c225_i32 dim 1 : vector<1x256xf32>, i32 -> vector<1x256xf32>
    %c225_i32_105 = arith.constant 225 : i32
    %562 = tpu.dynamic_rotate %7 by %c225_i32_105 dim 1 : vector<1x256xf32>, i32 -> vector<1x256xf32>
    %c37 = arith.constant 37 : index
    %563 = memref.load %arg1[%c37] : memref<98xf32, #tpu.memory_space<smem>>
    %c86 = arith.constant 86 : index
    %564 = memref.load %arg1[%c86] : memref<98xf32, #tpu.memory_space<smem>>
    %565 = vector.broadcast %563 : f32 to vector<1x256xf32>
    %566 = arith.mulf %565, %561 : vector<1x256xf32>
    %567 = vector.broadcast %564 : f32 to vector<1x256xf32>
    %568 = arith.mulf %567, %562 : vector<1x256xf32>
    %569 = arith.addf %566, %568 : vector<1x256xf32>
    %570 = arith.andi %65, %40 : vector<1x256xi1>
    %cst_106 = arith.constant 0.000000e+00 : f32
    %571 = vector.broadcast %cst_106 : f32 to vector<1x256xf32>
    %572 = arith.select %570, %569, %571 : vector<1x256xi1>, vector<1x256xf32>
    %573 = arith.addf %560, %572 : vector<1x256xf32>
    %c224_i32 = arith.constant 224 : i32
    %574 = tpu.dynamic_rotate %3 by %c224_i32 dim 1 : vector<1x256xf32>, i32 -> vector<1x256xf32>
    %c224_i32_107 = arith.constant 224 : i32
    %575 = tpu.dynamic_rotate %7 by %c224_i32_107 dim 1 : vector<1x256xf32>, i32 -> vector<1x256xf32>
    %c38 = arith.constant 38 : index
    %576 = memref.load %arg1[%c38] : memref<98xf32, #tpu.memory_space<smem>>
    %c87 = arith.constant 87 : index
    %577 = memref.load %arg1[%c87] : memref<98xf32, #tpu.memory_space<smem>>
    %578 = vector.broadcast %576 : f32 to vector<1x256xf32>
    %579 = arith.mulf %578, %574 : vector<1x256xf32>
    %580 = vector.broadcast %577 : f32 to vector<1x256xf32>
    %581 = arith.mulf %580, %575 : vector<1x256xf32>
    %582 = arith.addf %579, %581 : vector<1x256xf32>
    %583 = arith.andi %65, %50 : vector<1x256xi1>
    %cst_108 = arith.constant 0.000000e+00 : f32
    %584 = vector.broadcast %cst_108 : f32 to vector<1x256xf32>
    %585 = arith.select %583, %582, %584 : vector<1x256xi1>, vector<1x256xf32>
    %586 = arith.addf %573, %585 : vector<1x256xf32>
    %c223_i32 = arith.constant 223 : i32
    %587 = tpu.dynamic_rotate %3 by %c223_i32 dim 1 : vector<1x256xf32>, i32 -> vector<1x256xf32>
    %c223_i32_109 = arith.constant 223 : i32
    %588 = tpu.dynamic_rotate %7 by %c223_i32_109 dim 1 : vector<1x256xf32>, i32 -> vector<1x256xf32>
    %c39 = arith.constant 39 : index
    %589 = memref.load %arg1[%c39] : memref<98xf32, #tpu.memory_space<smem>>
    %c88 = arith.constant 88 : index
    %590 = memref.load %arg1[%c88] : memref<98xf32, #tpu.memory_space<smem>>
    %591 = vector.broadcast %589 : f32 to vector<1x256xf32>
    %592 = arith.mulf %591, %587 : vector<1x256xf32>
    %593 = vector.broadcast %590 : f32 to vector<1x256xf32>
    %594 = arith.mulf %593, %588 : vector<1x256xf32>
    %595 = arith.addf %592, %594 : vector<1x256xf32>
    %596 = arith.andi %65, %60 : vector<1x256xi1>
    %cst_110 = arith.constant 0.000000e+00 : f32
    %597 = vector.broadcast %cst_110 : f32 to vector<1x256xf32>
    %598 = arith.select %596, %595, %597 : vector<1x256xi1>, vector<1x256xf32>
    %599 = arith.addf %586, %598 : vector<1x256xf32>
    %c222_i32 = arith.constant 222 : i32
    %600 = tpu.dynamic_rotate %3 by %c222_i32 dim 1 : vector<1x256xf32>, i32 -> vector<1x256xf32>
    %c222_i32_111 = arith.constant 222 : i32
    %601 = tpu.dynamic_rotate %7 by %c222_i32_111 dim 1 : vector<1x256xf32>, i32 -> vector<1x256xf32>
    %c40 = arith.constant 40 : index
    %602 = memref.load %arg1[%c40] : memref<98xf32, #tpu.memory_space<smem>>
    %c89 = arith.constant 89 : index
    %603 = memref.load %arg1[%c89] : memref<98xf32, #tpu.memory_space<smem>>
    %604 = vector.broadcast %602 : f32 to vector<1x256xf32>
    %605 = arith.mulf %604, %600 : vector<1x256xf32>
    %606 = vector.broadcast %603 : f32 to vector<1x256xf32>
    %607 = arith.mulf %606, %601 : vector<1x256xf32>
    %608 = arith.addf %605, %607 : vector<1x256xf32>
    %609 = arith.andi %65, %70 : vector<1x256xi1>
    %cst_112 = arith.constant 0.000000e+00 : f32
    %610 = vector.broadcast %cst_112 : f32 to vector<1x256xf32>
    %611 = arith.select %609, %608, %610 : vector<1x256xi1>, vector<1x256xf32>
    %612 = arith.addf %599, %611 : vector<1x256xf32>
    %c221_i32 = arith.constant 221 : i32
    %613 = tpu.dynamic_rotate %3 by %c221_i32 dim 1 : vector<1x256xf32>, i32 -> vector<1x256xf32>
    %c221_i32_113 = arith.constant 221 : i32
    %614 = tpu.dynamic_rotate %7 by %c221_i32_113 dim 1 : vector<1x256xf32>, i32 -> vector<1x256xf32>
    %c41 = arith.constant 41 : index
    %615 = memref.load %arg1[%c41] : memref<98xf32, #tpu.memory_space<smem>>
    %c90 = arith.constant 90 : index
    %616 = memref.load %arg1[%c90] : memref<98xf32, #tpu.memory_space<smem>>
    %617 = vector.broadcast %615 : f32 to vector<1x256xf32>
    %618 = arith.mulf %617, %613 : vector<1x256xf32>
    %619 = vector.broadcast %616 : f32 to vector<1x256xf32>
    %620 = arith.mulf %619, %614 : vector<1x256xf32>
    %621 = arith.addf %618, %620 : vector<1x256xf32>
    %622 = arith.andi %65, %80 : vector<1x256xi1>
    %cst_114 = arith.constant 0.000000e+00 : f32
    %623 = vector.broadcast %cst_114 : f32 to vector<1x256xf32>
    %624 = arith.select %622, %621, %623 : vector<1x256xi1>, vector<1x256xf32>
    %625 = arith.addf %612, %624 : vector<1x256xf32>
    %c211_i32 = arith.constant 211 : i32
    %626 = tpu.dynamic_rotate %3 by %c211_i32 dim 1 : vector<1x256xf32>, i32 -> vector<1x256xf32>
    %c211_i32_115 = arith.constant 211 : i32
    %627 = tpu.dynamic_rotate %7 by %c211_i32_115 dim 1 : vector<1x256xf32>, i32 -> vector<1x256xf32>
    %c42 = arith.constant 42 : index
    %628 = memref.load %arg1[%c42] : memref<98xf32, #tpu.memory_space<smem>>
    %c91 = arith.constant 91 : index
    %629 = memref.load %arg1[%c91] : memref<98xf32, #tpu.memory_space<smem>>
    %630 = vector.broadcast %628 : f32 to vector<1x256xf32>
    %631 = arith.mulf %630, %626 : vector<1x256xf32>
    %632 = vector.broadcast %629 : f32 to vector<1x256xf32>
    %633 = arith.mulf %632, %627 : vector<1x256xf32>
    %634 = arith.addf %631, %633 : vector<1x256xf32>
    %635 = arith.andi %75, %20 : vector<1x256xi1>
    %cst_116 = arith.constant 0.000000e+00 : f32
    %636 = vector.broadcast %cst_116 : f32 to vector<1x256xf32>
    %637 = arith.select %635, %634, %636 : vector<1x256xi1>, vector<1x256xf32>
    %638 = arith.addf %625, %637 : vector<1x256xf32>
    %c210_i32 = arith.constant 210 : i32
    %639 = tpu.dynamic_rotate %3 by %c210_i32 dim 1 : vector<1x256xf32>, i32 -> vector<1x256xf32>
    %c210_i32_117 = arith.constant 210 : i32
    %640 = tpu.dynamic_rotate %7 by %c210_i32_117 dim 1 : vector<1x256xf32>, i32 -> vector<1x256xf32>
    %c43 = arith.constant 43 : index
    %641 = memref.load %arg1[%c43] : memref<98xf32, #tpu.memory_space<smem>>
    %c92 = arith.constant 92 : index
    %642 = memref.load %arg1[%c92] : memref<98xf32, #tpu.memory_space<smem>>
    %643 = vector.broadcast %641 : f32 to vector<1x256xf32>
    %644 = arith.mulf %643, %639 : vector<1x256xf32>
    %645 = vector.broadcast %642 : f32 to vector<1x256xf32>
    %646 = arith.mulf %645, %640 : vector<1x256xf32>
    %647 = arith.addf %644, %646 : vector<1x256xf32>
    %648 = arith.andi %75, %30 : vector<1x256xi1>
    %cst_118 = arith.constant 0.000000e+00 : f32
    %649 = vector.broadcast %cst_118 : f32 to vector<1x256xf32>
    %650 = arith.select %648, %647, %649 : vector<1x256xi1>, vector<1x256xf32>
    %651 = arith.addf %638, %650 : vector<1x256xf32>
    %c209_i32 = arith.constant 209 : i32
    %652 = tpu.dynamic_rotate %3 by %c209_i32 dim 1 : vector<1x256xf32>, i32 -> vector<1x256xf32>
    %c209_i32_119 = arith.constant 209 : i32
    %653 = tpu.dynamic_rotate %7 by %c209_i32_119 dim 1 : vector<1x256xf32>, i32 -> vector<1x256xf32>
    %c44 = arith.constant 44 : index
    %654 = memref.load %arg1[%c44] : memref<98xf32, #tpu.memory_space<smem>>
    %c93 = arith.constant 93 : index
    %655 = memref.load %arg1[%c93] : memref<98xf32, #tpu.memory_space<smem>>
    %656 = vector.broadcast %654 : f32 to vector<1x256xf32>
    %657 = arith.mulf %656, %652 : vector<1x256xf32>
    %658 = vector.broadcast %655 : f32 to vector<1x256xf32>
    %659 = arith.mulf %658, %653 : vector<1x256xf32>
    %660 = arith.addf %657, %659 : vector<1x256xf32>
    %661 = arith.andi %75, %40 : vector<1x256xi1>
    %cst_120 = arith.constant 0.000000e+00 : f32
    %662 = vector.broadcast %cst_120 : f32 to vector<1x256xf32>
    %663 = arith.select %661, %660, %662 : vector<1x256xi1>, vector<1x256xf32>
    %664 = arith.addf %651, %663 : vector<1x256xf32>
    %c208_i32 = arith.constant 208 : i32
    %665 = tpu.dynamic_rotate %3 by %c208_i32 dim 1 : vector<1x256xf32>, i32 -> vector<1x256xf32>
    %c208_i32_121 = arith.constant 208 : i32
    %666 = tpu.dynamic_rotate %7 by %c208_i32_121 dim 1 : vector<1x256xf32>, i32 -> vector<1x256xf32>
    %c45 = arith.constant 45 : index
    %667 = memref.load %arg1[%c45] : memref<98xf32, #tpu.memory_space<smem>>
    %c94 = arith.constant 94 : index
    %668 = memref.load %arg1[%c94] : memref<98xf32, #tpu.memory_space<smem>>
    %669 = vector.broadcast %667 : f32 to vector<1x256xf32>
    %670 = arith.mulf %669, %665 : vector<1x256xf32>
    %671 = vector.broadcast %668 : f32 to vector<1x256xf32>
    %672 = arith.mulf %671, %666 : vector<1x256xf32>
    %673 = arith.addf %670, %672 : vector<1x256xf32>
    %674 = arith.andi %75, %50 : vector<1x256xi1>
    %cst_122 = arith.constant 0.000000e+00 : f32
    %675 = vector.broadcast %cst_122 : f32 to vector<1x256xf32>
    %676 = arith.select %674, %673, %675 : vector<1x256xi1>, vector<1x256xf32>
    %677 = arith.addf %664, %676 : vector<1x256xf32>
    %c207_i32 = arith.constant 207 : i32
    %678 = tpu.dynamic_rotate %3 by %c207_i32 dim 1 : vector<1x256xf32>, i32 -> vector<1x256xf32>
    %c207_i32_123 = arith.constant 207 : i32
    %679 = tpu.dynamic_rotate %7 by %c207_i32_123 dim 1 : vector<1x256xf32>, i32 -> vector<1x256xf32>
    %c46 = arith.constant 46 : index
    %680 = memref.load %arg1[%c46] : memref<98xf32, #tpu.memory_space<smem>>
    %c95 = arith.constant 95 : index
    %681 = memref.load %arg1[%c95] : memref<98xf32, #tpu.memory_space<smem>>
    %682 = vector.broadcast %680 : f32 to vector<1x256xf32>
    %683 = arith.mulf %682, %678 : vector<1x256xf32>
    %684 = vector.broadcast %681 : f32 to vector<1x256xf32>
    %685 = arith.mulf %684, %679 : vector<1x256xf32>
    %686 = arith.addf %683, %685 : vector<1x256xf32>
    %687 = arith.andi %75, %60 : vector<1x256xi1>
    %cst_124 = arith.constant 0.000000e+00 : f32
    %688 = vector.broadcast %cst_124 : f32 to vector<1x256xf32>
    %689 = arith.select %687, %686, %688 : vector<1x256xi1>, vector<1x256xf32>
    %690 = arith.addf %677, %689 : vector<1x256xf32>
    %c206_i32 = arith.constant 206 : i32
    %691 = tpu.dynamic_rotate %3 by %c206_i32 dim 1 : vector<1x256xf32>, i32 -> vector<1x256xf32>
    %c206_i32_125 = arith.constant 206 : i32
    %692 = tpu.dynamic_rotate %7 by %c206_i32_125 dim 1 : vector<1x256xf32>, i32 -> vector<1x256xf32>
    %c47 = arith.constant 47 : index
    %693 = memref.load %arg1[%c47] : memref<98xf32, #tpu.memory_space<smem>>
    %c96 = arith.constant 96 : index
    %694 = memref.load %arg1[%c96] : memref<98xf32, #tpu.memory_space<smem>>
    %695 = vector.broadcast %693 : f32 to vector<1x256xf32>
    %696 = arith.mulf %695, %691 : vector<1x256xf32>
    %697 = vector.broadcast %694 : f32 to vector<1x256xf32>
    %698 = arith.mulf %697, %692 : vector<1x256xf32>
    %699 = arith.addf %696, %698 : vector<1x256xf32>
    %700 = arith.andi %75, %70 : vector<1x256xi1>
    %cst_126 = arith.constant 0.000000e+00 : f32
    %701 = vector.broadcast %cst_126 : f32 to vector<1x256xf32>
    %702 = arith.select %700, %699, %701 : vector<1x256xi1>, vector<1x256xf32>
    %703 = arith.addf %690, %702 : vector<1x256xf32>
    %c205_i32 = arith.constant 205 : i32
    %704 = tpu.dynamic_rotate %3 by %c205_i32 dim 1 : vector<1x256xf32>, i32 -> vector<1x256xf32>
    %c205_i32_127 = arith.constant 205 : i32
    %705 = tpu.dynamic_rotate %7 by %c205_i32_127 dim 1 : vector<1x256xf32>, i32 -> vector<1x256xf32>
    %c48 = arith.constant 48 : index
    %706 = memref.load %arg1[%c48] : memref<98xf32, #tpu.memory_space<smem>>
    %c97 = arith.constant 97 : index
    %707 = memref.load %arg1[%c97] : memref<98xf32, #tpu.memory_space<smem>>
    %708 = vector.broadcast %706 : f32 to vector<1x256xf32>
    %709 = arith.mulf %708, %704 : vector<1x256xf32>
    %710 = vector.broadcast %707 : f32 to vector<1x256xf32>
    %711 = arith.mulf %710, %705 : vector<1x256xf32>
    %712 = arith.addf %709, %711 : vector<1x256xf32>
    %713 = arith.andi %75, %80 : vector<1x256xi1>
    %cst_128 = arith.constant 0.000000e+00 : f32
    %714 = vector.broadcast %cst_128 : f32 to vector<1x256xf32>
    %715 = arith.select %713, %712, %714 : vector<1x256xi1>, vector<1x256xf32>
    %716 = arith.addf %703, %715 : vector<1x256xf32>
    %717 = arith.negf %716 : vector<1x256xf32>
    %718 = math.exp %717 : vector<1x256xf32>
    %cst_129 = arith.constant 1.000000e+00 : f32
    %719 = vector.broadcast %cst_129 : f32 to vector<1x256xf32>
    %720 = arith.addf %719, %718 : vector<1x256xf32>
    %721 = arith.divf %719, %720 : vector<1x256xf32>
    %722 = vector.broadcast %721 : vector<1x256xf32> to vector<4x256xf32>
    %723 = arith.mulf %1, %722 : vector<4x256xf32>
    %c0_130 = arith.constant 0 : index
    %c0_131 = arith.constant 0 : index
    %c0_132 = arith.constant 0 : index
    %724 = vector.load %arg4[%c0_130, %c0_131, %c0_132] : memref<1x4x256xf32, #tpu.memory_space<vmem>>, vector<1x4x256xf32>
    %725 = vector.shape_cast %724 : vector<1x4x256xf32> to vector<4x256xf32>
    %726 = vector.shape_cast %723 : vector<4x256xf32> to vector<1x4x256xf32>
    tpu.vector_store %arg4[%c0_130, %c0_131, %c0_132], %726 {strides = array<i32>} : memref<1x4x256xf32, #tpu.memory_space<vmem>>, vector<1x4x256xf32>,
    return
  }
  func.func @transform_0(%arg0: i32) -> i32 {
    %c0_i32 = arith.constant 0 : i32
    %c0_i32_0 = arith.constant 0 : i32
    return %c0_i32 : i32
  }
  func.func @transform_1(%arg0: i32) -> (i32, i32) {
    %c0_i32 = arith.constant 0 : i32
    %c0_i32_0 = arith.constant 0 : i32
    %c0_i32_1 = arith.constant 0 : i32
    return %c0_i32, %c0_i32_0 : i32, i32
  }
  func.func @transform_2(%arg0: i32) -> (i32, i32, i32) {
    %c0_i32 = arith.constant 0 : i32
    %c0_i32_0 = arith.constant 0 : i32
    %c0_i32_1 = arith.constant 0 : i32
    return %arg0, %c0_i32, %c0_i32_0 : i32, i32, i32
  }
  func.func @transform_3(%arg0: i32) -> (i32, i32, i32) {
    %c0_i32 = arith.constant 0 : i32
    %c0_i32_0 = arith.constant 0 : i32
    %c0_i32_1 = arith.constant 0 : i32
    return %arg0, %c0_i32, %c0_i32_0 : i32, i32, i32
  }
}

</mosaic_0001>

<llo_original>
// kernel: tpu_custom_call.1
$region0: #{tpu_custom_call.1}
  #allocation0 [shape = 'u32[]', space=smem, size = 0x4, offset = 0x4, fixed_abs, tag = 'smem constant byte address 0x4 - core index']
  #allocation1 [shape = 'u32[144,128]{1,0:T(1,128)}', space=vmem, size = 0x12000, scoped, tag = 'internal scratch']
  %s0 = inlined_call_operand.hbm [shape: f32[98], index: 0, kind: input, shape index: {}]
  %s1 = inlined_call_operand.hbm [shape: s32[2,256], index: 1, kind: input, shape index: {}]
  %s2 = inlined_call_operand.hbm [shape: f32[2,4,256], index: 2, kind: input, shape index: {}]
  %s3 = inlined_call_operand.hbm [shape: f32[2,4,256], index: 3, kind: output, shape index: {}]
  %s4 = sld [smem:[#allocation0]]
  $region57: #{tpu_custom_call.1} parent=0
    _
  %s6 = ssub.s32 1, %s4
  %s7 = scalar_select 0, %s6, %s4
  $region1: #{tpu_custom_call.1} parent=0
    #allocation2 [shape = 'u8[512]{0}', space=smem, size = 0x200, scoped, tag = 'input window, operand 0, single buffered']
    #allocation3 [shape = 's32[2]{0}', space=sflag, size = 0x8, scoped, tag = 'scoped memory for tpu_custom_call.1']
    #allocation4 [shape = 's32[2]{0}', space=sflag, size = 0x8, scoped, tag = 'scoped memory for tpu_custom_call.1']
    #allocation5 [shape = 's32[2]{0}', space=sflag, size = 0x8, scoped, tag = 'scoped memory for tpu_custom_call.1']
    #allocation6 [shape = 'u8[2048]{0}', space=vmem, size = 0x800, scoped, tag = 'input window, operand 1, single buffered']
    #allocation7 [shape = 'u8[8192]{0}', space=vmem, size = 0x2000, scoped, tag = 'input window, operand 2']
    #allocation8 [shape = 's32[2]{0}', space=sflag, size = 0x8, scoped, tag = 'scoped memory for tpu_custom_call.1']
    #allocation9 [shape = 'u8[8192]{0}', space=vmem, size = 0x2000, scoped, tag = 'output window, operand 0']
    %8 = vsyncpa [#allocation5], 0
    %9 = vsyncpa [#allocation3], 0
    %10 = vsyncpa [#allocation8], 0
    %s11 = scalar_lea.sflag [#allocation8], 1
    %12 = vsyncpa %s11, 0
    %13 = vsyncpa [#allocation4], 0
    %s14 = scalar_lea.sflag [#allocation4], 1
    %15 = vsyncpa %s14, 0
    loop: start=0, step=1, limit=4
    $region2: #{tpu_custom_call.1} parent=1 // loop_pre_header
      _
    $region3: #{tpu_custom_call.1} parent=1 // loop_header
      %s17 = sphi 0, %s21
      %p18 = scmp.ge.s32.totalorder %s17, 4
      %s25 = sphi 0, %s25
      %s27 = sphi 0, %s25
      %s28 = sphi 0, %s27
      %s42 = sphi 0, %s28
      %s46 = sphi 0, %s46
      %s48 = sphi 0, %s46
      %s49 = sphi 0, %s48
      %s63 = sphi 0, %s49
      %s69 = sphi 0, %s71
      %s72 = sphi 0, %s69
      %s73 = sphi 0, %s72
      %s89 = sphi 0, %s73
      %s95 = sphi 0, %s97
      %s98 = sphi 0, %s95
      %s99 = sphi 0, %s98
      %s115 = sphi 0, %s99
    $region4: #{tpu_custom_call.1} parent=1 // loop_header_branch
      %20 = sbr.rel (%p18) target = $region8
    $region5: #{tpu_custom_call.1} parent=1 // loop_body
      %s22 = ssub.s32 %s17, 1
      %s23 = ssub.s32 %s17, 2
      %s24 = sadd.s32 %s17, 1
      %s26 = sadd.s32 %s25, 1
      %p29 = scmp.eq.s32.totalorder %s17, 1
      %p30 = scmp.ne.s32.totalorder %s25, %s27
      %p31 = scmp.eq.s32.totalorder %s17, 0
      %p32 = por %p30, %p31
      %p33 = scmp.ne.s32.totalorder %s25, %s27
      %p34 = scmp.eq.s32.totalorder %s22, 1
      %p35 = por %p33, %p34
      %p36 = scmp.ne.s32.totalorder %s27, %s28
      %p37 = scmp.eq.s32.totalorder %s22, 0
      %p38 = por %p36, %p37
      %p39 = scmp.ne.s32.totalorder %s27, %s28
      %p40 = scmp.eq.s32.totalorder %s23, 1
      %p41 = por %p39, %p40
      %p43 = scmp.ne.s32.totalorder %s28, %s42
      %p44 = scmp.eq.s32.totalorder %s23, 0
      %p45 = por %p43, %p44
      %s47 = sadd.s32 %s46, 1
      %p50 = scmp.eq.s32.totalorder %s17, 1
      %p51 = scmp.ne.s32.totalorder %s46, %s48
      %p52 = scmp.eq.s32.totalorder %s17, 0
      %p53 = por %p51, %p52
      %p54 = scmp.ne.s32.totalorder %s46, %s48
      %p55 = scmp.eq.s32.totalorder %s22, 1
      %p56 = por %p54, %p55
      %p57 = scmp.ne.s32.totalorder %s48, %s49
      %p58 = scmp.eq.s32.totalorder %s22, 0
      %p59 = por %p57, %p58
      %p60 = scmp.ne.s32.totalorder %s48, %s49
      %p61 = scmp.eq.s32.totalorder %s23, 1
      %p62 = por %p60, %p61
      %p64 = scmp.ne.s32.totalorder %s49, %s63
      %p65 = scmp.eq.s32.totalorder %s23, 0
      %p66 = por %p64, %p65
      %s67 = ssub.s32 %s17, %s24
      %p68 = scmp.eq.s32.totalorder %s67, 0
      %s70 = sadd.s32 %s69, 1
      %s71 = scalar_select %p68, %s69, %s70
      %p74 = pneg %p68
      %p75 = scmp.eq.s32.totalorder %s17, 1
      %p76 = por %p74, %p75
      %p77 = scmp.ne.s32.totalorder %s69, %s72
      %p78 = scmp.eq.s32.totalorder %s17, 0
      %p79 = por %p77, %p78
      %p80 = scmp.ne.s32.totalorder %s69, %s72
      %p81 = scmp.eq.s32.totalorder %s22, 1
      %p82 = por %p80, %p81
      %p83 = scmp.ne.s32.totalorder %s72, %s73
      %p84 = scmp.eq.s32.totalorder %s22, 0
      %p85 = por %p83, %p84
      %p86 = scmp.ne.s32.totalorder %s72, %s73
      %p87 = scmp.eq.s32.totalorder %s23, 1
      %p88 = por %p86, %p87
      %p90 = scmp.ne.s32.totalorder %s73, %s89
      %p91 = scmp.eq.s32.totalorder %s23, 0
      %p92 = por %p90, %p91
      %s93 = ssub.s32 %s17, %s24
      %p94 = scmp.eq.s32.totalorder %s93, 0
      %s96 = sadd.s32 %s95, 1
      %s97 = scalar_select %p94, %s95, %s96
      %p100 = pneg %p94
      %p101 = scmp.eq.s32.totalorder %s17, 1
      %p102 = por %p100, %p101
      %p103 = scmp.ne.s32.totalorder %s95, %s98
      %p104 = scmp.eq.s32.totalorder %s17, 0
      %p105 = por %p103, %p104
      %p106 = scmp.ne.s32.totalorder %s95, %s98
      %p107 = scmp.eq.s32.totalorder %s22, 1
      %p108 = por %p106, %p107
      %p109 = scmp.ne.s32.totalorder %s98, %s99
      %p110 = scmp.eq.s32.totalorder %s22, 0
      %p111 = por %p109, %p110
      %p112 = scmp.ne.s32.totalorder %s98, %s99
      %p113 = scmp.eq.s32.totalorder %s23, 1
      %p114 = por %p112, %p113
      %p116 = scmp.ne.s32.totalorder %s99, %s115
      %p117 = scmp.eq.s32.totalorder %s23, 0
      %p118 = por %p116, %p117
      %p119 = scmp.le.s32.totalorder 1, %s17
      %p120 = scmp.lt.s32.totalorder %s17, 3
      %p121 = pnand %p119, %p120
      %p122 = pneg %p121
      // Predicated region
      $region9: #{tpu_custom_call.1} parent=5 // pred_check
        _
      $region10: #{tpu_custom_call.1} parent=5 // pred_check_branch
        %124 = sbr.rel (%p121) target = $region12
      $region11: #{tpu_custom_call.1} parent=5 // pred_region
        %s125 = ssub.s32 %s17, 1
        // Predicated region
        $region13: #{tpu_custom_call.1} parent=11 // pred_check
          %p126 = pneg %p38
        $region14: #{tpu_custom_call.1} parent=11 // pred_check_branch
          %128 = sbr.rel (%p126) target = $region16
        $region15: #{tpu_custom_call.1} parent=11 // pred_region
          %s130 = ssub.s32 16, 16
          %131 = vsyncadd [#allocation5], %s130
          %134 = dma.hbm_to_smem %s0, 16, [#allocation2], [#allocation5]
        $region16: #{tpu_custom_call.1} parent=11 // pred_fallthru
          _
        // Predicated region
        $region17: #{tpu_custom_call.1} parent=11 // pred_check
          %p135 = pneg %p59
        $region18: #{tpu_custom_call.1} parent=11 // pred_check_branch
          %137 = sbr.rel (%p135) target = $region20
        $region19: #{tpu_custom_call.1} parent=11 // pred_region
          %s139 = ssub.s32 64, 64
          %140 = vsyncadd [#allocation3], %s139
          %s142 = sshll.u32 [#allocation6], 4
          %s143 = int_to_ptr.vmem [resolvable:$true] %s142
          %145 = dma.hbm_to_vmem [thread:$0]  %s1, 64, %s143, [#allocation3]
        $region20: #{tpu_custom_call.1} parent=11 // pred_fallthru
          _
      $region12: #{tpu_custom_call.1} parent=5 // pred_fallthru
        _
      %p146 = scmp.lt.s32.totalorder %s17, 2
      // Predicated region
      $region21: #{tpu_custom_call.1} parent=5 // pred_check
        %p147 = pneg %p146
      $region22: #{tpu_custom_call.1} parent=5 // pred_check_branch
        %149 = sbr.rel (%p147) target = $region24
      $region23: #{tpu_custom_call.1} parent=5 // pred_region
        // Predicated region
        $region25: #{tpu_custom_call.1} parent=23 // pred_check
          %p150 = pneg %p79
        $region26: #{tpu_custom_call.1} parent=23 // pred_check_branch
          %152 = sbr.rel (%p150) target = $region28
        $region27: #{tpu_custom_call.1} parent=23 // pred_region
          %s153 = sand.u32 %s69, 1
          %s154 = scalar_lea.sflag [#allocation8], %s153
          %s155 = sand.u32 %s69, 1
          %s156 = smul.addr %s155, 8
          %s157 = scalar_lea.vmem [#allocation7], %s156
          %s159 = ssub.s32 128, 128
          %160 = vsyncadd %s154, %s159
          %s161 = smul.addr %s17, 2
          %s162 = smul.addr %s161, 64
          %s163 = scalar_lea.hbm %s2, %s162
          %s165 = sshll.u32 %s157, 4
          %s166 = int_to_ptr.vmem [resolvable:$true] %s165
          %168 = dma.hbm_to_vmem [thread:$0]  %s163, 128, %s166, %s154
        $region28: #{tpu_custom_call.1} parent=23 // pred_fallthru
          _
      $region24: #{tpu_custom_call.1} parent=5 // pred_fallthru
        _
      %p169 = scmp.le.s32.totalorder 1, %s17
      %p170 = scmp.lt.s32.totalorder %s17, 3
      %p171 = pnand %p169, %p170
      %p172 = pneg %p171
      // Predicated region
      $region29: #{tpu_custom_call.1} parent=5 // pred_check
        _
      $region30: #{tpu_custom_call.1} parent=5 // pred_check_branch
        %174 = sbr.rel (%p171) target = $region32
      $region31: #{tpu_custom_call.1} parent=5 // pred_region
        %s175 = ssub.s32 %s17, 1
        // Predicated region
        $region33: #{tpu_custom_call.1} parent=31 // pred_check
          %p176 = pneg %p38
        $region34: #{tpu_custom_call.1} parent=31 // pred_check_branch
          %178 = sbr.rel (%p176) target = $region36
        $region35: #{tpu_custom_call.1} parent=31 // pred_region
          %179 = dma.done [#allocation5], 16
        $region36: #{tpu_custom_call.1} parent=31 // pred_fallthru
          _
        // Predicated region
        $region37: #{tpu_custom_call.1} parent=31 // pred_check
          %p180 = pneg %p59
        $region38: #{tpu_custom_call.1} parent=31 // pred_check_branch
          %182 = sbr.rel (%p180) target = $region40
        $region39: #{tpu_custom_call.1} parent=31 // pred_region
          %183 = dma.done [#allocation3], 64
        $region40: #{tpu_custom_call.1} parent=31 // pred_fallthru
          _
        %s184 = sand.u32 %s72, 1
        %s185 = scalar_lea.sflag [#allocation8], %s184
        %s186 = sand.u32 %s72, 1
        %s187 = smul.addr %s186, 8
        %s188 = scalar_lea.vmem [#allocation7], %s187
        // Predicated region
        $region41: #{tpu_custom_call.1} parent=31 // pred_check
          %p189 = pneg %p85
        $region42: #{tpu_custom_call.1} parent=31 // pred_check_branch
          %191 = sbr.rel (%p189) target = $region44
        $region43: #{tpu_custom_call.1} parent=31 // pred_region
          %192 = dma.done %s185, 128
        $region44: #{tpu_custom_call.1} parent=31 // pred_fallthru
          _
        %193 = sfence
        %p194 = pneg %p38
        %p195 = pneg %p35
        %p196 = pneg %p59
        %p197 = pneg %p56
        %s198 = sand.u32 %s72, 1
        %s199 = scalar_lea.sflag [#allocation8], %s198
        %s200 = sand.u32 %s72, 1
        %s201 = smul.addr %s200, 8
        %s202 = scalar_lea.vmem [#allocation7], %s201
        %p203 = pneg %p85
        %p204 = pneg %p82
        %p205 = pneg %p111
        %p206 = pneg %p108
        %s207 = sand.u32 %s98, 1
        %s208 = scalar_lea.sflag [#allocation4], %s207
        %s209 = sand.u32 %s98, 1
        %s210 = smul.addr %s209, 8
        %s211 = scalar_lea.vmem [#allocation9], %s210
        %v212 = vld [vmem:[%s188] sm:$0xff]
        %v214 = vcombine.high %v212, %v212
        %vm216 = vcmask 1043456
        %v217 = vsel %vm216, %v212, -inf
        %v218 = vrot.slane %v217, 4
        %v219 = vmax.f32 %v217, %v218
        %v220 = vrot.slane %v219, 2
        %v221 = vmax.f32 %v219, %v220
        %v222 = vrot.slane %v221, 1
        %v223 = vmax.f32 %v221, %v222
        %v224 = vsel %vm216, %v214, -inf
        %v225 = vrot.slane %v224, 4
        %v226 = vmax.f32 %v224, %v225
        %v227 = vrot.slane %v226, 2
        %v228 = vmax.f32 %v226, %v227
        %v229 = vrot.slane %v228, 1
        %v230 = vmax.f32 %v228, %v229
        %v231 = vsel %vm216, %v212, 0.0
        %v232 = vrot.slane %v231, 4
        %v233 = vadd.f32 %v231, %v232
        %v234 = vrot.slane %v233, 2
        %v235 = vadd.f32 %v233, %v234
        %v236 = vrot.slane %v235, 1
        %v237 = vadd.f32 %v235, %v236
        %v238 = vsel %vm216, %v214, 0.0
        %v239 = vrot.slane %v238, 4
        %v240 = vadd.f32 %v238, %v239
        %v241 = vrot.slane %v240, 2
        %v242 = vadd.f32 %v240, %v241
        %v243 = vrot.slane %v242, 1
        %v244 = vadd.f32 %v242, %v243
        %v245 = vmul.f32 %v237, 0.25
        %v246 = vmul.f32 %v244, 0.25
        %v247 = vld [vmem:[#allocation6] sm:$0xf]
        %vm248 = vcmp.ge.s32.totalorder %v247, 3
        %vm249 = vcmp.lt.s32.totalorder %v247, 19
        %vm250 = vmand %vm248, %vm249
        %vm251 = vcmp.ge.s32.totalorder %v247, 2
        %vm252 = vcmp.lt.s32.totalorder %v247, 18
        %vm253 = vmand %vm251, %vm252
        %vm254 = vcmp.ge.s32.totalorder %v247, 1
        %vm255 = vcmp.lt.s32.totalorder %v247, 17
        %vm256 = vmand %vm254, %vm255
        %vm257 = vcmp.ge.s32.totalorder %v247, 0
        %vm258 = vcmp.lt.s32.totalorder %v247, 16
        %vm259 = vmand %vm257, %vm258
        %vm260 = vcmp.ge.s32.totalorder %v247, 4294967295
        %vm261 = vcmp.lt.s32.totalorder %v247, 15
        %vm262 = vmand %vm260, %vm261
        %vm263 = vcmp.ge.s32.totalorder %v247, 4294967294
        %vm264 = vcmp.lt.s32.totalorder %v247, 14
        %vm265 = vmand %vm263, %vm264
        %vm266 = vcmp.ge.s32.totalorder %v247, 4294967293
        %vm267 = vcmp.lt.s32.totalorder %v247, 13
        %vm268 = vmand %vm266, %vm267
        %269 = vrot.lane.b32.xlu0 %v223, 51
        %v270 = vpop.permute.xlu0 %269
        %271 = vrot.lane.b32.xlu0 %v230, 51
        %v272 = vpop.permute.xlu0 %271
        %v273 = vlaneseq
        %v274 = vand.u32 %v273, 127
        %vm275 = vcmp.lt.s32.totalorder %v274, 51
        %v276 = vsel %vm275, %v270, %v272
        %v277 = vsel %vm275, %v272, %v270
        %278 = vrot.lane.b32.xlu0 %v245, 51
        %v279 = vpop.permute.xlu0 %278
        %280 = vrot.lane.b32.xlu0 %v246, 51
        %v281 = vpop.permute.xlu0 %280
        %v282 = vsel %vm275, %v279, %v281
        %v283 = vsel %vm275, %v281, %v279
        %s284 = sld [smem:[#allocation2]]
        %s285 = sld [smem:[#allocation2 + $0x31]]
        %v286 = vstv %s284
        %v287 = vmul.f32 %v286, %v277
        %v288 = vmul.f32 %v286, %v276
        %v289 = vstv %s285
        %v290 = vmul.f32 %v289, %v283
        %v291 = vmul.f32 %v289, %v282
        %v292 = vadd.f32 %v287, %v290
        %v293 = vadd.f32 %v288, %v291
        %v294 = vsel %vm250, 1, 0
        %v295 = vrot.slane %v294, 7
        %v296 = vrot.slane %v295, 2
        %vm297 = vcmp.ne.s32.totalorder %v296, 0
        %vm298 = vmand %vm250, %vm297
        %v301 = vcombine.low %v292, %v293
        %v303 = vunpack.c.l.s4 1983009808
        %v304 = vunpack.c.0.s8 %v303
        %v305 = vlaneseq
        %v306 = vshrl.u32 %v305, 7
        %v307 = vsub.s32 %v304, %v306
        %v308 = vrot.slane %v301, %v307
        %v310 = vsel %vm298, %v308, 0.0
        %v311 = vadd.f32 %v310, 0.0
        %312 = vrot.lane.b32.xlu0 %v223, 50
        %v313 = vpop.permute.xlu0 %312
        %314 = vrot.lane.b32.xlu0 %v230, 50
        %v315 = vpop.permute.xlu0 %314
        %vm316 = vcmp.lt.s32.totalorder %v274, 50
        %v317 = vsel %vm316, %v313, %v315
        %v318 = vsel %vm316, %v315, %v313
        %319 = vrot.lane.b32.xlu0 %v245, 50
        %v320 = vpop.permute.xlu0 %319
        %321 = vrot.lane.b32.xlu0 %v246, 50
        %v322 = vpop.permute.xlu0 %321
        %v323 = vsel %vm316, %v320, %v322
        %v324 = vsel %vm316, %v322, %v320
        %s325 = sld [smem:[#allocation2 + $0x1]]
        %s326 = sld [smem:[#allocation2 + $0x32]]
        %v327 = vstv %s325
        %v328 = vmul.f32 %v327, %v318
        %v329 = vmul.f32 %v327, %v317
        %v330 = vstv %s326
        %v331 = vmul.f32 %v330, %v324
        %v332 = vmul.f32 %v330, %v323
        %v333 = vadd.f32 %v328, %v331
        %v334 = vadd.f32 %v329, %v332
        %v335 = vsel %vm253, 1, 0
        %v336 = vrot.slane %v335, 7
        %v337 = vrot.slane %v336, 2
        %vm338 = vcmp.ne.s32.totalorder %v337, 0
        %vm339 = vmand %vm250, %vm338
        %v342 = vcombine.low %v333, %v334
        %v344 = vunpack.c.l.s4 1983009808
        %v345 = vunpack.c.0.s8 %v344
        %v346 = vlaneseq
        %v347 = vshrl.u32 %v346, 7
        %v348 = vsub.s32 %v345, %v347
        %v349 = vrot.slane %v342, %v348
        %v351 = vsel %vm339, %v349, 0.0
        %v352 = vadd.f32 %v311, %v351
        %353 = vrot.lane.b32.xlu0 %v223, 49
        %v354 = vpop.permute.xlu0 %353
        %355 = vrot.lane.b32.xlu0 %v230, 49
        %v356 = vpop.permute.xlu0 %355
        %vm357 = vcmp.lt.s32.totalorder %v274, 49
        %v358 = vsel %vm357, %v354, %v356
        %v359 = vsel %vm357, %v356, %v354
        %360 = vrot.lane.b32.xlu0 %v245, 49
        %v361 = vpop.permute.xlu0 %360
        %362 = vrot.lane.b32.xlu0 %v246, 49
        %v363 = vpop.permute.xlu0 %362
        %v364 = vsel %vm357, %v361, %v363
        %v365 = vsel %vm357, %v363, %v361
        %s366 = sld [smem:[#allocation2 + $0x2]]
        %s367 = sld [smem:[#allocation2 + $0x33]]
        %v368 = vstv %s366
        %v369 = vmul.f32 %v368, %v359
        %v370 = vmul.f32 %v368, %v358
        %v371 = vstv %s367
        %v372 = vmul.f32 %v371, %v365
        %v373 = vmul.f32 %v371, %v364
        %v374 = vadd.f32 %v369, %v372
        %v375 = vadd.f32 %v370, %v373
        %v376 = vsel %vm256, 1, 0
        %v377 = vrot.slane %v376, 7
        %v378 = vrot.slane %v377, 2
        %vm379 = vcmp.ne.s32.totalorder %v378, 0
        %vm380 = vmand %vm250, %vm379
        %v383 = vcombine.low %v374, %v375
        %v385 = vunpack.c.l.s4 1983009808
        %v386 = vunpack.c.0.s8 %v385
        %v387 = vlaneseq
        %v388 = vshrl.u32 %v387, 7
        %v389 = vsub.s32 %v386, %v388
        %v390 = vrot.slane %v383, %v389
        %v392 = vsel %vm380, %v390, 0.0
        %v393 = vadd.f32 %v352, %v392
        %394 = vrot.lane.b32.xlu0 %v223, 48
        %v395 = vpop.permute.xlu0 %394
        %396 = vrot.lane.b32.xlu0 %v230, 48
        %v397 = vpop.permute.xlu0 %396
        %vm398 = vcmp.lt.s32.totalorder %v274, 48
        %v399 = vsel %vm398, %v395, %v397
        %v400 = vsel %vm398, %v397, %v395
        %401 = vrot.lane.b32.xlu0 %v245, 48
        %v402 = vpop.permute.xlu0 %401
        %403 = vrot.lane.b32.xlu0 %v246, 48
        %v404 = vpop.permute.xlu0 %403
        %v405 = vsel %vm398, %v402, %v404
        %v406 = vsel %vm398, %v404, %v402
        %s407 = sld [smem:[#allocation2 + $0x3]]
        %s408 = sld [smem:[#allocation2 + $0x34]]
        %v409 = vstv %s407
        %v410 = vmul.f32 %v409, %v400
        %v411 = vmul.f32 %v409, %v399
        %v412 = vstv %s408
        %v413 = vmul.f32 %v412, %v406
        %v414 = vmul.f32 %v412, %v405
        %v415 = vadd.f32 %v410, %v413
        %v416 = vadd.f32 %v411, %v414
        %v417 = vsel %vm259, 1, 0
        %v418 = vrot.slane %v417, 7
        %v419 = vrot.slane %v418, 2
        %vm420 = vcmp.ne.s32.totalorder %v419, 0
        %vm421 = vmand %vm250, %vm420
        %v424 = vcombine.low %v415, %v416
        %v426 = vunpack.c.l.s4 1983009808
        %v427 = vunpack.c.0.s8 %v426
        %v428 = vlaneseq
        %v429 = vshrl.u32 %v428, 7
        %v430 = vsub.s32 %v427, %v429
        %v431 = vrot.slane %v424, %v430
        %v433 = vsel %vm421, %v431, 0.0
        %v434 = vadd.f32 %v393, %v433
        %435 = vrot.lane.b32.xlu0 %v223, 47
        %v436 = vpop.permute.xlu0 %435
        %437 = vrot.lane.b32.xlu0 %v230, 47
        %v438 = vpop.permute.xlu0 %437
        %vm439 = vcmp.lt.s32.totalorder %v274, 47
        %v440 = vsel %vm439, %v436, %v438
        %v441 = vsel %vm439, %v438, %v436
        %442 = vrot.lane.b32.xlu0 %v245, 47
        %v443 = vpop.permute.xlu0 %442
        %444 = vrot.lane.b32.xlu0 %v246, 47
        %v445 = vpop.permute.xlu0 %444
        %v446 = vsel %vm439, %v443, %v445
        %v447 = vsel %vm439, %v445, %v443
        %s448 = sld [smem:[#allocation2 + $0x4]]
        %s449 = sld [smem:[#allocation2 + $0x35]]
        %v450 = vstv %s448
        %v451 = vmul.f32 %v450, %v441
        %v452 = vmul.f32 %v450, %v440
        %v453 = vstv %s449
        %v454 = vmul.f32 %v453, %v447
        %v455 = vmul.f32 %v453, %v446
        %v456 = vadd.f32 %v451, %v454
        %v457 = vadd.f32 %v452, %v455
        %v458 = vsel %vm262, 1, 0
        %v459 = vrot.slane %v458, 7
        %v460 = vrot.slane %v459, 2
        %vm461 = vcmp.ne.s32.totalorder %v460, 0
        %vm462 = vmand %vm250, %vm461
        %v465 = vcombine.low %v456, %v457
        %v467 = vunpack.c.l.s4 1983009808
        %v468 = vunpack.c.0.s8 %v467
        %v469 = vlaneseq
        %v470 = vshrl.u32 %v469, 7
        %v471 = vsub.s32 %v468, %v470
        %v472 = vrot.slane %v465, %v471
        %v474 = vsel %vm462, %v472, 0.0
        %v475 = vadd.f32 %v434, %v474
        %476 = vrot.lane.b32.xlu0 %v223, 46
        %v477 = vpop.permute.xlu0 %476
        %478 = vrot.lane.b32.xlu0 %v230, 46
        %v479 = vpop.permute.xlu0 %478
        %vm480 = vcmp.lt.s32.totalorder %v274, 46
        %v481 = vsel %vm480, %v477, %v479
        %v482 = vsel %vm480, %v479, %v477
        %483 = vrot.lane.b32.xlu0 %v245, 46
        %v484 = vpop.permute.xlu0 %483
        %485 = vrot.lane.b32.xlu0 %v246, 46
        %v486 = vpop.permute.xlu0 %485
        %v487 = vsel %vm480, %v484, %v486
        %v488 = vsel %vm480, %v486, %v484
        %s489 = sld [smem:[#allocation2 + $0x5]]
        %s490 = sld [smem:[#allocation2 + $0x36]]
        %v491 = vstv %s489
        %v492 = vmul.f32 %v491, %v482
        %v493 = vmul.f32 %v491, %v481
        %v494 = vstv %s490
        %v495 = vmul.f32 %v494, %v488
        %v496 = vmul.f32 %v494, %v487
        %v497 = vadd.f32 %v492, %v495
        %v498 = vadd.f32 %v493, %v496
        %v499 = vsel %vm265, 1, 0
        %v500 = vrot.slane %v499, 7
        %v501 = vrot.slane %v500, 2
        %vm502 = vcmp.ne.s32.totalorder %v501, 0
        %vm503 = vmand %vm250, %vm502
        %v506 = vcombine.low %v497, %v498
        %v508 = vunpack.c.l.s4 1983009808
        %v509 = vunpack.c.0.s8 %v508
        %v510 = vlaneseq
        %v511 = vshrl.u32 %v510, 7
        %v512 = vsub.s32 %v509, %v511
        %v513 = vrot.slane %v506, %v512
        %v515 = vsel %vm503, %v513, 0.0
        %v516 = vadd.f32 %v475, %v515
        %517 = vrot.lane.b32.xlu0 %v223, 45
        %v518 = vpop.permute.xlu0 %517
        %519 = vrot.lane.b32.xlu0 %v230, 45
        %v520 = vpop.permute.xlu0 %519
        %vm521 = vcmp.lt.s32.totalorder %v274, 45
        %v522 = vsel %vm521, %v518, %v520
        %v523 = vsel %vm521, %v520, %v518
        %524 = vrot.lane.b32.xlu0 %v245, 45
        %v525 = vpop.permute.xlu0 %524
        %526 = vrot.lane.b32.xlu0 %v246, 45
        %v527 = vpop.permute.xlu0 %526
        %v528 = vsel %vm521, %v525, %v527
        %v529 = vsel %vm521, %v527, %v525
        %s530 = sld [smem:[#allocation2 + $0x6]]
        %s531 = sld [smem:[#allocation2 + $0x37]]
        %v532 = vstv %s530
        %v533 = vmul.f32 %v532, %v523
        %v534 = vmul.f32 %v532, %v522
        %v535 = vstv %s531
        %v536 = vmul.f32 %v535, %v529
        %v537 = vmul.f32 %v535, %v528
        %v538 = vadd.f32 %v533, %v536
        %v539 = vadd.f32 %v534, %v537
        %v540 = vsel %vm268, 1, 0
        %v541 = vrot.slane %v540, 7
        %v542 = vrot.slane %v541, 2
        %vm543 = vcmp.ne.s32.totalorder %v542, 0
        %vm544 = vmand %vm250, %vm543
        %v547 = vcombine.low %v538, %v539
        %v549 = vunpack.c.l.s4 1983009808
        %v550 = vunpack.c.0.s8 %v549
        %v551 = vlaneseq
        %v552 = vshrl.u32 %v551, 7
        %v553 = vsub.s32 %v550, %v552
        %v554 = vrot.slane %v547, %v553
        %v556 = vsel %vm544, %v554, 0.0
        %v557 = vadd.f32 %v516, %v556
        %558 = vrot.lane.b32.xlu0 %v223, 35
        %v559 = vpop.permute.xlu0 %558
        %560 = vrot.lane.b32.xlu0 %v230, 35
        %v561 = vpop.permute.xlu0 %560
        %vm562 = vcmp.lt.s32.totalorder %v274, 35
        %v563 = vsel %vm562, %v559, %v561
        %v564 = vsel %vm562, %v561, %v559
        %565 = vrot.lane.b32.xlu0 %v245, 35
        %v566 = vpop.permute.xlu0 %565
        %567 = vrot.lane.b32.xlu0 %v246, 35
        %v568 = vpop.permute.xlu0 %567
        %v569 = vsel %vm562, %v566, %v568
        %v570 = vsel %vm562, %v568, %v566
        %s571 = sld [smem:[#allocation2 + $0x7]]
        %s572 = sld [smem:[#allocation2 + $0x38]]
        %v573 = vstv %s571
        %v574 = vmul.f32 %v573, %v564
        %v575 = vmul.f32 %v573, %v563
        %v576 = vstv %s572
        %v577 = vmul.f32 %v576, %v570
        %v578 = vmul.f32 %v576, %v569
        %v579 = vadd.f32 %v574, %v577
        %v580 = vadd.f32 %v575, %v578
        %vm581 = vmand %vm253, %vm297
        %v584 = vcombine.low %v579, %v580
        %v586 = vunpack.c.l.s4 1983009808
        %v587 = vunpack.c.0.s8 %v586
        %v588 = vlaneseq
        %v589 = vshrl.u32 %v588, 7
        %v590 = vsub.s32 %v587, %v589
        %v591 = vrot.slane %v584, %v590
        %v593 = vsel %vm581, %v591, 0.0
        %v594 = vadd.f32 %v557, %v593
        %595 = vrot.lane.b32.xlu0 %v223, 34
        %v596 = vpop.permute.xlu0 %595
        %597 = vrot.lane.b32.xlu0 %v230, 34
        %v598 = vpop.permute.xlu0 %597
        %vm599 = vcmp.lt.s32.totalorder %v274, 34
        %v600 = vsel %vm599, %v596, %v598
        %v601 = vsel %vm599, %v598, %v596
        %602 = vrot.lane.b32.xlu0 %v245, 34
        %v603 = vpop.permute.xlu0 %602
        %604 = vrot.lane.b32.xlu0 %v246, 34
        %v605 = vpop.permute.xlu0 %604
        %v606 = vsel %vm599, %v603, %v605
        %v607 = vsel %vm599, %v605, %v603
        %s608 = sld [smem:[#allocation2 + $0x8]]
        %s609 = sld [smem:[#allocation2 + $0x39]]
        %v610 = vstv %s608
        %v611 = vmul.f32 %v610, %v601
        %v612 = vmul.f32 %v610, %v600
        %v613 = vstv %s609
        %v614 = vmul.f32 %v613, %v607
        %v615 = vmul.f32 %v613, %v606
        %v616 = vadd.f32 %v611, %v614
        %v617 = vadd.f32 %v612, %v615
        %vm618 = vmand %vm253, %vm338
        %v621 = vcombine.low %v616, %v617
        %v623 = vunpack.c.l.s4 1983009808
        %v624 = vunpack.c.0.s8 %v623
        %v625 = vlaneseq
        %v626 = vshrl.u32 %v625, 7
        %v627 = vsub.s32 %v624, %v626
        %v628 = vrot.slane %v621, %v627
        %v630 = vsel %vm618, %v628, 0.0
        %v631 = vadd.f32 %v594, %v630
        %632 = vrot.lane.b32.xlu0 %v223, 33
        %v633 = vpop.permute.xlu0 %632
        %634 = vrot.lane.b32.xlu0 %v230, 33
        %v635 = vpop.permute.xlu0 %634
        %vm636 = vcmp.lt.s32.totalorder %v274, 33
        %v637 = vsel %vm636, %v633, %v635
        %v638 = vsel %vm636, %v635, %v633
        %639 = vrot.lane.b32.xlu0 %v245, 33
        %v640 = vpop.permute.xlu0 %639
        %641 = vrot.lane.b32.xlu0 %v246, 33
        %v642 = vpop.permute.xlu0 %641
        %v643 = vsel %vm636, %v640, %v642
        %v644 = vsel %vm636, %v642, %v640
        %s645 = sld [smem:[#allocation2 + $0x9]]
        %s646 = sld [smem:[#allocation2 + $0x3a]]
        %v647 = vstv %s645
        %v648 = vmul.f32 %v647, %v638
        %v649 = vmul.f32 %v647, %v637
        %v650 = vstv %s646
        %v651 = vmul.f32 %v650, %v644
        %v652 = vmul.f32 %v650, %v643
        %v653 = vadd.f32 %v648, %v651
        %v654 = vadd.f32 %v649, %v652
        %vm655 = vmand %vm253, %vm379
        %v658 = vcombine.low %v653, %v654
        %v660 = vunpack.c.l.s4 1983009808
        %v661 = vunpack.c.0.s8 %v660
        %v662 = vlaneseq
        %v663 = vshrl.u32 %v662, 7
        %v664 = vsub.s32 %v661, %v663
        %v665 = vrot.slane %v658, %v664
        %v667 = vsel %vm655, %v665, 0.0
        %v668 = vadd.f32 %v631, %v667
        %669 = vrot.lane.b32.xlu0 %v223, 32
        %v670 = vpop.permute.xlu0 %669
        %671 = vrot.lane.b32.xlu0 %v230, 32
        %v672 = vpop.permute.xlu0 %671
        %vm673 = vcmp.lt.s32.totalorder %v274, 32
        %v674 = vsel %vm673, %v670, %v672
        %v675 = vsel %vm673, %v672, %v670
        %676 = vrot.lane.b32.xlu0 %v245, 32
        %v677 = vpop.permute.xlu0 %676
        %678 = vrot.lane.b32.xlu0 %v246, 32
        %v679 = vpop.permute.xlu0 %678
        %v680 = vsel %vm673, %v677, %v679
        %v681 = vsel %vm673, %v679, %v677
        %s682 = sld [smem:[#allocation2 + $0xa]]
        %s683 = sld [smem:[#allocation2 + $0x3b]]
        %v684 = vstv %s682
        %v685 = vmul.f32 %v684, %v675
        %v686 = vmul.f32 %v684, %v674
        %v687 = vstv %s683
        %v688 = vmul.f32 %v687, %v681
        %v689 = vmul.f32 %v687, %v680
        %v690 = vadd.f32 %v685, %v688
        %v691 = vadd.f32 %v686, %v689
        %vm692 = vmand %vm253, %vm420
        %v695 = vcombine.low %v690, %v691
        %v697 = vunpack.c.l.s4 1983009808
        %v698 = vunpack.c.0.s8 %v697
        %v699 = vlaneseq
        %v700 = vshrl.u32 %v699, 7
        %v701 = vsub.s32 %v698, %v700
        %v702 = vrot.slane %v695, %v701
        %v704 = vsel %vm692, %v702, 0.0
        %v705 = vadd.f32 %v668, %v704
        %706 = vrot.lane.b32.xlu0 %v223, 31
        %v707 = vpop.permute.xlu0 %706
        %708 = vrot.lane.b32.xlu0 %v230, 31
        %v709 = vpop.permute.xlu0 %708
        %vm710 = vcmp.lt.s32.totalorder %v274, 31
        %v711 = vsel %vm710, %v707, %v709
        %v712 = vsel %vm710, %v709, %v707
        %713 = vrot.lane.b32.xlu0 %v245, 31
        %v714 = vpop.permute.xlu0 %713
        %715 = vrot.lane.b32.xlu0 %v246, 31
        %v716 = vpop.permute.xlu0 %715
        %v717 = vsel %vm710, %v714, %v716
        %v718 = vsel %vm710, %v716, %v714
        %s719 = sld [smem:[#allocation2 + $0xb]]
        %s720 = sld [smem:[#allocation2 + $0x3c]]
        %v721 = vstv %s719
        %v722 = vmul.f32 %v721, %v712
        %v723 = vmul.f32 %v721, %v711
        %v724 = vstv %s720
        %v725 = vmul.f32 %v724, %v718
        %v726 = vmul.f32 %v724, %v717
        %v727 = vadd.f32 %v722, %v725
        %v728 = vadd.f32 %v723, %v726
        %vm729 = vmand %vm253, %vm461
        %v732 = vcombine.low %v727, %v728
        %v734 = vunpack.c.l.s4 1983009808
        %v735 = vunpack.c.0.s8 %v734
        %v736 = vlaneseq
        %v737 = vshrl.u32 %v736, 7
        %v738 = vsub.s32 %v735, %v737
        %v739 = vrot.slane %v732, %v738
        %v741 = vsel %vm729, %v739, 0.0
        %v742 = vadd.f32 %v705, %v741
        %743 = vrot.lane.b32.xlu0 %v223, 30
        %v744 = vpop.permute.xlu0 %743
        %745 = vrot.lane.b32.xlu0 %v230, 30
        %v746 = vpop.permute.xlu0 %745
        %vm747 = vcmp.lt.s32.totalorder %v274, 30
        %v748 = vsel %vm747, %v744, %v746
        %v749 = vsel %vm747, %v746, %v744
        %750 = vrot.lane.b32.xlu0 %v245, 30
        %v751 = vpop.permute.xlu0 %750
        %752 = vrot.lane.b32.xlu0 %v246, 30
        %v753 = vpop.permute.xlu0 %752
        %v754 = vsel %vm747, %v751, %v753
        %v755 = vsel %vm747, %v753, %v751
        %s756 = sld [smem:[#allocation2 + $0xc]]
        %s757 = sld [smem:[#allocation2 + $0x3d]]
        %v758 = vstv %s756
        %v759 = vmul.f32 %v758, %v749
        %v760 = vmul.f32 %v758, %v748
        %v761 = vstv %s757
        %v762 = vmul.f32 %v761, %v755
        %v763 = vmul.f32 %v761, %v754
        %v764 = vadd.f32 %v759, %v762
        %v765 = vadd.f32 %v760, %v763
        %vm766 = vmand %vm253, %vm502
        %v769 = vcombine.low %v764, %v765
        %v771 = vunpack.c.l.s4 1983009808
        %v772 = vunpack.c.0.s8 %v771
        %v773 = vlaneseq
        %v774 = vshrl.u32 %v773, 7
        %v775 = vsub.s32 %v772, %v774
        %v776 = vrot.slane %v769, %v775
        %v778 = vsel %vm766, %v776, 0.0
        %v779 = vadd.f32 %v742, %v778
        %780 = vrot.lane.b32.xlu0 %v223, 29
        %v781 = vpop.permute.xlu0 %780
        %782 = vrot.lane.b32.xlu0 %v230, 29
        %v783 = vpop.permute.xlu0 %782
        %vm784 = vcmp.lt.s32.totalorder %v274, 29
        %v785 = vsel %vm784, %v781, %v783
        %v786 = vsel %vm784, %v783, %v781
        %787 = vrot.lane.b32.xlu0 %v245, 29
        %v788 = vpop.permute.xlu0 %787
        %789 = vrot.lane.b32.xlu0 %v246, 29
        %v790 = vpop.permute.xlu0 %789
        %v791 = vsel %vm784, %v788, %v790
        %v792 = vsel %vm784, %v790, %v788
        %s793 = sld [smem:[#allocation2 + $0xd]]
        %s794 = sld [smem:[#allocation2 + $0x3e]]
        %v795 = vstv %s793
        %v796 = vmul.f32 %v795, %v786
        %v797 = vmul.f32 %v795, %v785
        %v798 = vstv %s794
        %v799 = vmul.f32 %v798, %v792
        %v800 = vmul.f32 %v798, %v791
        %v801 = vadd.f32 %v796, %v799
        %v802 = vadd.f32 %v797, %v800
        %vm803 = vmand %vm253, %vm543
        %v806 = vcombine.low %v801, %v802
        %v808 = vunpack.c.l.s4 1983009808
        %v809 = vunpack.c.0.s8 %v808
        %v810 = vlaneseq
        %v811 = vshrl.u32 %v810, 7
        %v812 = vsub.s32 %v809, %v811
        %v813 = vrot.slane %v806, %v812
        %v815 = vsel %vm803, %v813, 0.0
        %v816 = vadd.f32 %v779, %v815
        %817 = vrot.lane.b32.xlu0 %v223, 19
        %v818 = vpop.permute.xlu0 %817
        %819 = vrot.lane.b32.xlu0 %v230, 19
        %v820 = vpop.permute.xlu0 %819
        %vm821 = vcmp.lt.s32.totalorder %v274, 19
        %v822 = vsel %vm821, %v818, %v820
        %v823 = vsel %vm821, %v820, %v818
        %824 = vrot.lane.b32.xlu0 %v245, 19
        %v825 = vpop.permute.xlu0 %824
        %826 = vrot.lane.b32.xlu0 %v246, 19
        %v827 = vpop.permute.xlu0 %826
        %v828 = vsel %vm821, %v825, %v827
        %v829 = vsel %vm821, %v827, %v825
        %s830 = sld [smem:[#allocation2 + $0xe]]
        %s831 = sld [smem:[#allocation2 + $0x3f]]
        %v832 = vstv %s830
        %v833 = vmul.f32 %v832, %v823
        %v834 = vmul.f32 %v832, %v822
        %v835 = vstv %s831
        %v836 = vmul.f32 %v835, %v829
        %v837 = vmul.f32 %v835, %v828
        %v838 = vadd.f32 %v833, %v836
        %v839 = vadd.f32 %v834, %v837
        %vm840 = vmand %vm256, %vm297
        %v843 = vcombine.low %v838, %v839
        %v845 = vunpack.c.l.s4 1983009808
        %v846 = vunpack.c.0.s8 %v845
        %v847 = vlaneseq
        %v848 = vshrl.u32 %v847, 7
        %v849 = vsub.s32 %v846, %v848
        %v850 = vrot.slane %v843, %v849
        %v852 = vsel %vm840, %v850, 0.0
        %v853 = vadd.f32 %v816, %v852
        %854 = vrot.lane.b32.xlu0 %v223, 18
        %v855 = vpop.permute.xlu0 %854
        %856 = vrot.lane.b32.xlu0 %v230, 18
        %v857 = vpop.permute.xlu0 %856
        %vm858 = vcmp.lt.s32.totalorder %v274, 18
        %v859 = vsel %vm858, %v855, %v857
        %v860 = vsel %vm858, %v857, %v855
        %861 = vrot.lane.b32.xlu0 %v245, 18
        %v862 = vpop.permute.xlu0 %861
        %863 = vrot.lane.b32.xlu0 %v246, 18
        %v864 = vpop.permute.xlu0 %863
        %v865 = vsel %vm858, %v862, %v864
        %v866 = vsel %vm858, %v864, %v862
        %s867 = sld [smem:[#allocation2 + $0xf]]
        %s868 = sld [smem:[#allocation2 + $0x40]]
        %v869 = vstv %s867
        %v870 = vmul.f32 %v869, %v860
        %v871 = vmul.f32 %v869, %v859
        %v872 = vstv %s868
        %v873 = vmul.f32 %v872, %v866
        %v874 = vmul.f32 %v872, %v865
        %v875 = vadd.f32 %v870, %v873
        %v876 = vadd.f32 %v871, %v874
        %vm877 = vmand %vm256, %vm338
        %v880 = vcombine.low %v875, %v876
        %v882 = vunpack.c.l.s4 1983009808
        %v883 = vunpack.c.0.s8 %v882
        %v884 = vlaneseq
        %v885 = vshrl.u32 %v884, 7
        %v886 = vsub.s32 %v883, %v885
        %v887 = vrot.slane %v880, %v886
        %v889 = vsel %vm877, %v887, 0.0
        %v890 = vadd.f32 %v853, %v889
        %891 = vrot.lane.b32.xlu0 %v223, 17
        %v892 = vpop.permute.xlu0 %891
        %893 = vrot.lane.b32.xlu0 %v230, 17
        %v894 = vpop.permute.xlu0 %893
        %vm895 = vcmp.lt.s32.totalorder %v274, 17
        %v896 = vsel %vm895, %v892, %v894
        %v897 = vsel %vm895, %v894, %v892
        %898 = vrot.lane.b32.xlu0 %v245, 17
        %v899 = vpop.permute.xlu0 %898
        %900 = vrot.lane.b32.xlu0 %v246, 17
        %v901 = vpop.permute.xlu0 %900
        %v902 = vsel %vm895, %v899, %v901
        %v903 = vsel %vm895, %v901, %v899
        %s904 = sld [smem:[#allocation2 + $0x10]]
        %s905 = sld [smem:[#allocation2 + $0x41]]
        %v906 = vstv %s904
        %v907 = vmul.f32 %v906, %v897
        %v908 = vmul.f32 %v906, %v896
        %v909 = vstv %s905
        %v910 = vmul.f32 %v909, %v903
        %v911 = vmul.f32 %v909, %v902
        %v912 = vadd.f32 %v907, %v910
        %v913 = vadd.f32 %v908, %v911
        %vm914 = vmand %vm256, %vm379
        %v917 = vcombine.low %v912, %v913
        %v919 = vunpack.c.l.s4 1983009808
        %v920 = vunpack.c.0.s8 %v919
        %v921 = vlaneseq
        %v922 = vshrl.u32 %v921, 7
        %v923 = vsub.s32 %v920, %v922
        %v924 = vrot.slane %v917, %v923
        %v926 = vsel %vm914, %v924, 0.0
        %v927 = vadd.f32 %v890, %v926
        %928 = vrot.lane.b32.xlu0 %v223, 16
        %v929 = vpop.permute.xlu0 %928
        %930 = vrot.lane.b32.xlu0 %v230, 16
        %v931 = vpop.permute.xlu0 %930
        %vm932 = vcmp.lt.s32.totalorder %v274, 16
        %v933 = vsel %vm932, %v929, %v931
        %v934 = vsel %vm932, %v931, %v929
        %935 = vrot.lane.b32.xlu0 %v245, 16
        %v936 = vpop.permute.xlu0 %935
        %937 = vrot.lane.b32.xlu0 %v246, 16
        %v938 = vpop.permute.xlu0 %937
        %v939 = vsel %vm932, %v936, %v938
        %v940 = vsel %vm932, %v938, %v936
        %s941 = sld [smem:[#allocation2 + $0x11]]
        %s942 = sld [smem:[#allocation2 + $0x42]]
        %v943 = vstv %s941
        %v944 = vmul.f32 %v943, %v934
        %v945 = vmul.f32 %v943, %v933
        %v946 = vstv %s942
        %v947 = vmul.f32 %v946, %v940
        %v948 = vmul.f32 %v946, %v939
        %v949 = vadd.f32 %v944, %v947
        %v950 = vadd.f32 %v945, %v948
        %vm951 = vmand %vm256, %vm420
        %v954 = vcombine.low %v949, %v950
        %v956 = vunpack.c.l.s4 1983009808
        %v957 = vunpack.c.0.s8 %v956
        %v958 = vlaneseq
        %v959 = vshrl.u32 %v958, 7
        %v960 = vsub.s32 %v957, %v959
        %v961 = vrot.slane %v954, %v960
        %v963 = vsel %vm951, %v961, 0.0
        %v964 = vadd.f32 %v927, %v963
        %965 = vrot.lane.b32.xlu0 %v223, 15
        %v966 = vpop.permute.xlu0 %965
        %967 = vrot.lane.b32.xlu0 %v230, 15
        %v968 = vpop.permute.xlu0 %967
        %vm969 = vcmp.lt.s32.totalorder %v274, 15
        %v970 = vsel %vm969, %v966, %v968
        %v971 = vsel %vm969, %v968, %v966
        %972 = vrot.lane.b32.xlu0 %v245, 15
        %v973 = vpop.permute.xlu0 %972
        %974 = vrot.lane.b32.xlu0 %v246, 15
        %v975 = vpop.permute.xlu0 %974
        %v976 = vsel %vm969, %v973, %v975
        %v977 = vsel %vm969, %v975, %v973
        %s978 = sld [smem:[#allocation2 + $0x12]]
        %s979 = sld [smem:[#allocation2 + $0x43]]
        %v980 = vstv %s978
        %v981 = vmul.f32 %v980, %v971
        %v982 = vmul.f32 %v980, %v970
        %v983 = vstv %s979
        %v984 = vmul.f32 %v983, %v977
        %v985 = vmul.f32 %v983, %v976
        %v986 = vadd.f32 %v981, %v984
        %v987 = vadd.f32 %v982, %v985
        %vm988 = vmand %vm256, %vm461
        %v991 = vcombine.low %v986, %v987
        %v993 = vunpack.c.l.s4 1983009808
        %v994 = vunpack.c.0.s8 %v993
        %v995 = vlaneseq
        %v996 = vshrl.u32 %v995, 7
        %v997 = vsub.s32 %v994, %v996
        %v998 = vrot.slane %v991, %v997
        %v1000 = vsel %vm988, %v998, 0.0
        %v1001 = vadd.f32 %v964, %v1000
        %1002 = vrot.lane.b32.xlu0 %v223, 14
        %v1003 = vpop.permute.xlu0 %1002
        %1004 = vrot.lane.b32.xlu0 %v230, 14
        %v1005 = vpop.permute.xlu0 %1004
        %vm1006 = vcmp.lt.s32.totalorder %v274, 14
        %v1007 = vsel %vm1006, %v1003, %v1005
        %v1008 = vsel %vm1006, %v1005, %v1003
        %1009 = vrot.lane.b32.xlu0 %v245, 14
        %v1010 = vpop.permute.xlu0 %1009
        %1011 = vrot.lane.b32.xlu0 %v246, 14
        %v1012 = vpop.permute.xlu0 %1011
        %v1013 = vsel %vm1006, %v1010, %v1012
        %v1014 = vsel %vm1006, %v1012, %v1010
        %s1015 = sld [smem:[#allocation2 + $0x13]]
        %s1016 = sld [smem:[#allocation2 + $0x44]]
        %v1017 = vstv %s1015
        %v1018 = vmul.f32 %v1017, %v1008
        %v1019 = vmul.f32 %v1017, %v1007
        %v1020 = vstv %s1016
        %v1021 = vmul.f32 %v1020, %v1014
        %v1022 = vmul.f32 %v1020, %v1013
        %v1023 = vadd.f32 %v1018, %v1021
        %v1024 = vadd.f32 %v1019, %v1022
        %vm1025 = vmand %vm256, %vm502
        %v1028 = vcombine.low %v1023, %v1024
        %v1030 = vunpack.c.l.s4 1983009808
        %v1031 = vunpack.c.0.s8 %v1030
        %v1032 = vlaneseq
        %v1033 = vshrl.u32 %v1032, 7
        %v1034 = vsub.s32 %v1031, %v1033
        %v1035 = vrot.slane %v1028, %v1034
        %v1037 = vsel %vm1025, %v1035, 0.0
        %v1038 = vadd.f32 %v1001, %v1037
        %1039 = vrot.lane.b32.xlu0 %v223, 13
        %v1040 = vpop.permute.xlu0 %1039
        %1041 = vrot.lane.b32.xlu0 %v230, 13
        %v1042 = vpop.permute.xlu0 %1041
        %vm1043 = vcmp.lt.s32.totalorder %v274, 13
        %v1044 = vsel %vm1043, %v1040, %v1042
        %v1045 = vsel %vm1043, %v1042, %v1040
        %1046 = vrot.lane.b32.xlu0 %v245, 13
        %v1047 = vpop.permute.xlu0 %1046
        %1048 = vrot.lane.b32.xlu0 %v246, 13
        %v1049 = vpop.permute.xlu0 %1048
        %v1050 = vsel %vm1043, %v1047, %v1049
        %v1051 = vsel %vm1043, %v1049, %v1047
        %s1052 = sld [smem:[#allocation2 + $0x14]]
        %s1053 = sld [smem:[#allocation2 + $0x45]]
        %v1054 = vstv %s1052
        %v1055 = vmul.f32 %v1054, %v1045
        %v1056 = vmul.f32 %v1054, %v1044
        %v1057 = vstv %s1053
        %v1058 = vmul.f32 %v1057, %v1051
        %v1059 = vmul.f32 %v1057, %v1050
        %v1060 = vadd.f32 %v1055, %v1058
        %v1061 = vadd.f32 %v1056, %v1059
        %vm1062 = vmand %vm256, %vm543
        %v1065 = vcombine.low %v1060, %v1061
        %v1067 = vunpack.c.l.s4 1983009808
        %v1068 = vunpack.c.0.s8 %v1067
        %v1069 = vlaneseq
        %v1070 = vshrl.u32 %v1069, 7
        %v1071 = vsub.s32 %v1068, %v1070
        %v1072 = vrot.slane %v1065, %v1071
        %v1074 = vsel %vm1062, %v1072, 0.0
        %v1075 = vadd.f32 %v1038, %v1074
        %1076 = vrot.lane.b32.xlu0 %v223, 3
        %v1077 = vpop.permute.xlu0 %1076
        %1078 = vrot.lane.b32.xlu0 %v230, 3
        %v1079 = vpop.permute.xlu0 %1078
        %vm1080 = vcmp.lt.s32.totalorder %v274, 3
        %v1081 = vsel %vm1080, %v1077, %v1079
        %v1082 = vsel %vm1080, %v1079, %v1077
        %1083 = vrot.lane.b32.xlu0 %v245, 3
        %v1084 = vpop.permute.xlu0 %1083
        %1085 = vrot.lane.b32.xlu0 %v246, 3
        %v1086 = vpop.permute.xlu0 %1085
        %v1087 = vsel %vm1080, %v1084, %v1086
        %v1088 = vsel %vm1080, %v1086, %v1084
        %s1089 = sld [smem:[#allocation2 + $0x15]]
        %s1090 = sld [smem:[#allocation2 + $0x46]]
        %v1091 = vstv %s1089
        %v1092 = vmul.f32 %v1091, %v1082
        %v1093 = vmul.f32 %v1091, %v1081
        %v1094 = vstv %s1090
        %v1095 = vmul.f32 %v1094, %v1088
        %v1096 = vmul.f32 %v1094, %v1087
        %v1097 = vadd.f32 %v1092, %v1095
        %v1098 = vadd.f32 %v1093, %v1096
        %vm1099 = vmand %vm259, %vm297
        %v1102 = vcombine.low %v1097, %v1098
        %v1104 = vunpack.c.l.s4 1983009808
        %v1105 = vunpack.c.0.s8 %v1104
        %v1106 = vlaneseq
        %v1107 = vshrl.u32 %v1106, 7
        %v1108 = vsub.s32 %v1105, %v1107
        %v1109 = vrot.slane %v1102, %v1108
        %v1111 = vsel %vm1099, %v1109, 0.0
        %v1112 = vadd.f32 %v1075, %v1111
        %1113 = vrot.lane.b32.xlu0 %v223, 2
        %v1114 = vpop.permute.xlu0 %1113
        %1115 = vrot.lane.b32.xlu0 %v230, 2
        %v1116 = vpop.permute.xlu0 %1115
        %vm1117 = vcmp.lt.s32.totalorder %v274, 2
        %v1118 = vsel %vm1117, %v1114, %v1116
        %v1119 = vsel %vm1117, %v1116, %v1114
        %1120 = vrot.lane.b32.xlu0 %v245, 2
        %v1121 = vpop.permute.xlu0 %1120
        %1122 = vrot.lane.b32.xlu0 %v246, 2
        %v1123 = vpop.permute.xlu0 %1122
        %v1124 = vsel %vm1117, %v1121, %v1123
        %v1125 = vsel %vm1117, %v1123, %v1121
        %s1126 = sld [smem:[#allocation2 + $0x16]]
        %s1127 = sld [smem:[#allocation2 + $0x47]]
        %v1128 = vstv %s1126
        %v1129 = vmul.f32 %v1128, %v1119
        %v1130 = vmul.f32 %v1128, %v1118
        %v1131 = vstv %s1127
        %v1132 = vmul.f32 %v1131, %v1125
        %v1133 = vmul.f32 %v1131, %v1124
        %v1134 = vadd.f32 %v1129, %v1132
        %v1135 = vadd.f32 %v1130, %v1133
        %vm1136 = vmand %vm259, %vm338
        %v1139 = vcombine.low %v1134, %v1135
        %v1141 = vunpack.c.l.s4 1983009808
        %v1142 = vunpack.c.0.s8 %v1141
        %v1143 = vlaneseq
        %v1144 = vshrl.u32 %v1143, 7
        %v1145 = vsub.s32 %v1142, %v1144
        %v1146 = vrot.slane %v1139, %v1145
        %v1148 = vsel %vm1136, %v1146, 0.0
        %v1149 = vadd.f32 %v1112, %v1148
        %1150 = vrot.lane.b32.xlu0 %v223, 1
        %v1151 = vpop.permute.xlu0 %1150
        %1152 = vrot.lane.b32.xlu0 %v230, 1
        %v1153 = vpop.permute.xlu0 %1152
        %vm1154 = vcmp.lt.s32.totalorder %v274, 1
        %v1155 = vsel %vm1154, %v1151, %v1153
        %v1156 = vsel %vm1154, %v1153, %v1151
        %1157 = vrot.lane.b32.xlu0 %v245, 1
        %v1158 = vpop.permute.xlu0 %1157
        %1159 = vrot.lane.b32.xlu0 %v246, 1
        %v1160 = vpop.permute.xlu0 %1159
        %v1161 = vsel %vm1154, %v1158, %v1160
        %v1162 = vsel %vm1154, %v1160, %v1158
        %s1163 = sld [smem:[#allocation2 + $0x17]]
        %s1164 = sld [smem:[#allocation2 + $0x48]]
        %v1165 = vstv %s1163
        %v1166 = vmul.f32 %v1165, %v1156
        %v1167 = vmul.f32 %v1165, %v1155
        %v1168 = vstv %s1164
        %v1169 = vmul.f32 %v1168, %v1162
        %v1170 = vmul.f32 %v1168, %v1161
        %v1171 = vadd.f32 %v1166, %v1169
        %v1172 = vadd.f32 %v1167, %v1170
        %vm1173 = vmand %vm259, %vm379
        %v1176 = vcombine.low %v1171, %v1172
        %v1178 = vunpack.c.l.s4 1983009808
        %v1179 = vunpack.c.0.s8 %v1178
        %v1180 = vlaneseq
        %v1181 = vshrl.u32 %v1180, 7
        %v1182 = vsub.s32 %v1179, %v1181
        %v1183 = vrot.slane %v1176, %v1182
        %v1185 = vsel %vm1173, %v1183, 0.0
        %v1186 = vadd.f32 %v1149, %v1185
        %s1187 = sld [smem:[#allocation2 + $0x18]]
        %s1188 = sld [smem:[#allocation2 + $0x49]]
        %v1189 = vstv %s1187
        %v1190 = vmul.f32 %v1189, %v223
        %v1191 = vmul.f32 %v1189, %v230
        %v1192 = vstv %s1188
        %v1193 = vmul.f32 %v1192, %v245
        %v1194 = vmul.f32 %v1192, %v246
        %v1195 = vadd.f32 %v1190, %v1193
        %v1196 = vadd.f32 %v1191, %v1194
        %vm1197 = vmand %vm259, %vm420
        %v1200 = vcombine.low %v1195, %v1196
        %v1202 = vunpack.c.l.s4 1983009808
        %v1203 = vunpack.c.0.s8 %v1202
        %v1204 = vlaneseq
        %v1205 = vshrl.u32 %v1204, 7
        %v1206 = vsub.s32 %v1203, %v1205
        %v1207 = vrot.slane %v1200, %v1206
        %v1209 = vsel %vm1197, %v1207, 0.0
        %v1210 = vadd.f32 %v1186, %v1209
        %1211 = vrot.lane.b32.xlu0 %v223, 127
        %v1212 = vpop.permute.xlu0 %1211
        %1213 = vrot.lane.b32.xlu0 %v230, 127
        %v1214 = vpop.permute.xlu0 %1213
        %vm1215 = vcmp.lt.s32.totalorder %v274, 127
        %v1216 = vsel %vm1215, %v1212, %v1214
        %v1217 = vsel %vm1215, %v1214, %v1212
        %1218 = vrot.lane.b32.xlu0 %v245, 127
        %v1219 = vpop.permute.xlu0 %1218
        %1220 = vrot.lane.b32.xlu0 %v246, 127
        %v1221 = vpop.permute.xlu0 %1220
        %v1222 = vsel %vm1215, %v1219, %v1221
        %v1223 = vsel %vm1215, %v1221, %v1219
        %s1224 = sld [smem:[#allocation2 + $0x19]]
        %s1225 = sld [smem:[#allocation2 + $0x4a]]
        %v1226 = vstv %s1224
        %v1227 = vmul.f32 %v1226, %v1216
        %v1228 = vmul.f32 %v1226, %v1217
        %v1229 = vstv %s1225
        %v1230 = vmul.f32 %v1229, %v1222
        %v1231 = vmul.f32 %v1229, %v1223
        %v1232 = vadd.f32 %v1227, %v1230
        %v1233 = vadd.f32 %v1228, %v1231
        %vm1234 = vmand %vm259, %vm461
        %v1237 = vcombine.low %v1232, %v1233
        %v1239 = vunpack.c.l.s4 1983009808
        %v1240 = vunpack.c.0.s8 %v1239
        %v1241 = vlaneseq
        %v1242 = vshrl.u32 %v1241, 7
        %v1243 = vsub.s32 %v1240, %v1242
        %v1244 = vrot.slane %v1237, %v1243
        %v1246 = vsel %vm1234, %v1244, 0.0
        %v1247 = vadd.f32 %v1210, %v1246
        %1248 = vrot.lane.b32.xlu0 %v223, 126
        %v1249 = vpop.permute.xlu0 %1248
        %1250 = vrot.lane.b32.xlu0 %v230, 126
        %v1251 = vpop.permute.xlu0 %1250
        %vm1252 = vcmp.lt.s32.totalorder %v274, 126
        %v1253 = vsel %vm1252, %v1249, %v1251
        %v1254 = vsel %vm1252, %v1251, %v1249
        %1255 = vrot.lane.b32.xlu0 %v245, 126
        %v1256 = vpop.permute.xlu0 %1255
        %1257 = vrot.lane.b32.xlu0 %v246, 126
        %v1258 = vpop.permute.xlu0 %1257
        %v1259 = vsel %vm1252, %v1256, %v1258
        %v1260 = vsel %vm1252, %v1258, %v1256
        %s1261 = sld [smem:[#allocation2 + $0x1a]]
        %s1262 = sld [smem:[#allocation2 + $0x4b]]
        %v1263 = vstv %s1261
        %v1264 = vmul.f32 %v1263, %v1253
        %v1265 = vmul.f32 %v1263, %v1254
        %v1266 = vstv %s1262
        %v1267 = vmul.f32 %v1266, %v1259
        %v1268 = vmul.f32 %v1266, %v1260
        %v1269 = vadd.f32 %v1264, %v1267
        %v1270 = vadd.f32 %v1265, %v1268
        %vm1271 = vmand %vm259, %vm502
        %v1274 = vcombine.low %v1269, %v1270
        %v1276 = vunpack.c.l.s4 1983009808
        %v1277 = vunpack.c.0.s8 %v1276
        %v1278 = vlaneseq
        %v1279 = vshrl.u32 %v1278, 7
        %v1280 = vsub.s32 %v1277, %v1279
        %v1281 = vrot.slane %v1274, %v1280
        %v1283 = vsel %vm1271, %v1281, 0.0
        %v1284 = vadd.f32 %v1247, %v1283
        %1285 = vrot.lane.b32.xlu0 %v223, 125
        %v1286 = vpop.permute.xlu0 %1285
        %1287 = vrot.lane.b32.xlu0 %v230, 125
        %v1288 = vpop.permute.xlu0 %1287
        %vm1289 = vcmp.lt.s32.totalorder %v274, 125
        %v1290 = vsel %vm1289, %v1286, %v1288
        %v1291 = vsel %vm1289, %v1288, %v1286
        %1292 = vrot.lane.b32.xlu0 %v245, 125
        %v1293 = vpop.permute.xlu0 %1292
        %1294 = vrot.lane.b32.xlu0 %v246, 125
        %v1295 = vpop.permute.xlu0 %1294
        %v1296 = vsel %vm1289, %v1293, %v1295
        %v1297 = vsel %vm1289, %v1295, %v1293
        %s1298 = sld [smem:[#allocation2 + $0x1b]]
        %s1299 = sld [smem:[#allocation2 + $0x4c]]
        %v1300 = vstv %s1298
        %v1301 = vmul.f32 %v1300, %v1290
        %v1302 = vmul.f32 %v1300, %v1291
        %v1303 = vstv %s1299
        %v1304 = vmul.f32 %v1303, %v1296
        %v1305 = vmul.f32 %v1303, %v1297
        %v1306 = vadd.f32 %v1301, %v1304
        %v1307 = vadd.f32 %v1302, %v1305
        %vm1308 = vmand %vm259, %vm543
        %v1311 = vcombine.low %v1306, %v1307
        %v1313 = vunpack.c.l.s4 1983009808
        %v1314 = vunpack.c.0.s8 %v1313
        %v1315 = vlaneseq
        %v1316 = vshrl.u32 %v1315, 7
        %v1317 = vsub.s32 %v1314, %v1316
        %v1318 = vrot.slane %v1311, %v1317
        %v1320 = vsel %vm1308, %v1318, 0.0
        %v1321 = vadd.f32 %v1284, %v1320
        %1322 = vrot.lane.b32.xlu0 %v223, 115
        %v1323 = vpop.permute.xlu0 %1322
        %1324 = vrot.lane.b32.xlu0 %v230, 115
        %v1325 = vpop.permute.xlu0 %1324
        %vm1326 = vcmp.lt.s32.totalorder %v274, 115
        %v1327 = vsel %vm1326, %v1323, %v1325
        %v1328 = vsel %vm1326, %v1325, %v1323
        %1329 = vrot.lane.b32.xlu0 %v245, 115
        %v1330 = vpop.permute.xlu0 %1329
        %1331 = vrot.lane.b32.xlu0 %v246, 115
        %v1332 = vpop.permute.xlu0 %1331
        %v1333 = vsel %vm1326, %v1330, %v1332
        %v1334 = vsel %vm1326, %v1332, %v1330
        %s1335 = sld [smem:[#allocation2 + $0x1c]]
        %s1336 = sld [smem:[#allocation2 + $0x4d]]
        %v1337 = vstv %s1335
        %v1338 = vmul.f32 %v1337, %v1327
        %v1339 = vmul.f32 %v1337, %v1328
        %v1340 = vstv %s1336
        %v1341 = vmul.f32 %v1340, %v1333
        %v1342 = vmul.f32 %v1340, %v1334
        %v1343 = vadd.f32 %v1338, %v1341
        %v1344 = vadd.f32 %v1339, %v1342
        %vm1345 = vmand %vm262, %vm297
        %v1348 = vcombine.low %v1343, %v1344
        %v1350 = vunpack.c.l.s4 1983009808
        %v1351 = vunpack.c.0.s8 %v1350
        %v1352 = vlaneseq
        %v1353 = vshrl.u32 %v1352, 7
        %v1354 = vsub.s32 %v1351, %v1353
        %v1355 = vrot.slane %v1348, %v1354
        %v1357 = vsel %vm1345, %v1355, 0.0
        %v1358 = vadd.f32 %v1321, %v1357
        %1359 = vrot.lane.b32.xlu0 %v223, 114
        %v1360 = vpop.permute.xlu0 %1359
        %1361 = vrot.lane.b32.xlu0 %v230, 114
        %v1362 = vpop.permute.xlu0 %1361
        %vm1363 = vcmp.lt.s32.totalorder %v274, 114
        %v1364 = vsel %vm1363, %v1360, %v1362
        %v1365 = vsel %vm1363, %v1362, %v1360
        %1366 = vrot.lane.b32.xlu0 %v245, 114
        %v1367 = vpop.permute.xlu0 %1366
        %1368 = vrot.lane.b32.xlu0 %v246, 114
        %v1369 = vpop.permute.xlu0 %1368
        %v1370 = vsel %vm1363, %v1367, %v1369
        %v1371 = vsel %vm1363, %v1369, %v1367
        %s1372 = sld [smem:[#allocation2 + $0x1d]]
        %s1373 = sld [smem:[#allocation2 + $0x4e]]
        %v1374 = vstv %s1372
        %v1375 = vmul.f32 %v1374, %v1364
        %v1376 = vmul.f32 %v1374, %v1365
        %v1377 = vstv %s1373
        %v1378 = vmul.f32 %v1377, %v1370
        %v1379 = vmul.f32 %v1377, %v1371
        %v1380 = vadd.f32 %v1375, %v1378
        %v1381 = vadd.f32 %v1376, %v1379
        %vm1382 = vmand %vm262, %vm338
        %v1385 = vcombine.low %v1380, %v1381
        %v1387 = vunpack.c.l.s4 1983009808
        %v1388 = vunpack.c.0.s8 %v1387
        %v1389 = vlaneseq
        %v1390 = vshrl.u32 %v1389, 7
        %v1391 = vsub.s32 %v1388, %v1390
        %v1392 = vrot.slane %v1385, %v1391
        %v1394 = vsel %vm1382, %v1392, 0.0
        %v1395 = vadd.f32 %v1358, %v1394
        %1396 = vrot.lane.b32.xlu0 %v223, 113
        %v1397 = vpop.permute.xlu0 %1396
        %1398 = vrot.lane.b32.xlu0 %v230, 113
        %v1399 = vpop.permute.xlu0 %1398
        %vm1400 = vcmp.lt.s32.totalorder %v274, 113
        %v1401 = vsel %vm1400, %v1397, %v1399
        %v1402 = vsel %vm1400, %v1399, %v1397
        %1403 = vrot.lane.b32.xlu0 %v245, 113
        %v1404 = vpop.permute.xlu0 %1403
        %1405 = vrot.lane.b32.xlu0 %v246, 113
        %v1406 = vpop.permute.xlu0 %1405
        %v1407 = vsel %vm1400, %v1404, %v1406
        %v1408 = vsel %vm1400, %v1406, %v1404
        %s1409 = sld [smem:[#allocation2 + $0x1e]]
        %s1410 = sld [smem:[#allocation2 + $0x4f]]
        %v1411 = vstv %s1409
        %v1412 = vmul.f32 %v1411, %v1401
        %v1413 = vmul.f32 %v1411, %v1402
        %v1414 = vstv %s1410
        %v1415 = vmul.f32 %v1414, %v1407
        %v1416 = vmul.f32 %v1414, %v1408
        %v1417 = vadd.f32 %v1412, %v1415
        %v1418 = vadd.f32 %v1413, %v1416
        %vm1419 = vmand %vm262, %vm379
        %v1422 = vcombine.low %v1417, %v1418
        %v1424 = vunpack.c.l.s4 1983009808
        %v1425 = vunpack.c.0.s8 %v1424
        %v1426 = vlaneseq
        %v1427 = vshrl.u32 %v1426, 7
        %v1428 = vsub.s32 %v1425, %v1427
        %v1429 = vrot.slane %v1422, %v1428
        %v1431 = vsel %vm1419, %v1429, 0.0
        %v1432 = vadd.f32 %v1395, %v1431
        %1433 = vrot.lane.b32.xlu0 %v223, 112
        %v1434 = vpop.permute.xlu0 %1433
        %1435 = vrot.lane.b32.xlu0 %v230, 112
        %v1436 = vpop.permute.xlu0 %1435
        %vm1437 = vcmp.lt.s32.totalorder %v274, 112
        %v1438 = vsel %vm1437, %v1434, %v1436
        %v1439 = vsel %vm1437, %v1436, %v1434
        %1440 = vrot.lane.b32.xlu0 %v245, 112
        %v1441 = vpop.permute.xlu0 %1440
        %1442 = vrot.lane.b32.xlu0 %v246, 112
        %v1443 = vpop.permute.xlu0 %1442
        %v1444 = vsel %vm1437, %v1441, %v1443
        %v1445 = vsel %vm1437, %v1443, %v1441
        %s1446 = sld [smem:[#allocation2 + $0x1f]]
        %s1447 = sld [smem:[#allocation2 + $0x50]]
        %v1448 = vstv %s1446
        %v1449 = vmul.f32 %v1448, %v1438
        %v1450 = vmul.f32 %v1448, %v1439
        %v1451 = vstv %s1447
        %v1452 = vmul.f32 %v1451, %v1444
        %v1453 = vmul.f32 %v1451, %v1445
        %v1454 = vadd.f32 %v1449, %v1452
        %v1455 = vadd.f32 %v1450, %v1453
        %vm1456 = vmand %vm262, %vm420
        %v1459 = vcombine.low %v1454, %v1455
        %v1461 = vunpack.c.l.s4 1983009808
        %v1462 = vunpack.c.0.s8 %v1461
        %v1463 = vlaneseq
        %v1464 = vshrl.u32 %v1463, 7
        %v1465 = vsub.s32 %v1462, %v1464
        %v1466 = vrot.slane %v1459, %v1465
        %v1468 = vsel %vm1456, %v1466, 0.0
        %v1469 = vadd.f32 %v1432, %v1468
        %1470 = vrot.lane.b32.xlu0 %v223, 111
        %v1471 = vpop.permute.xlu0 %1470
        %1472 = vrot.lane.b32.xlu0 %v230, 111
        %v1473 = vpop.permute.xlu0 %1472
        %vm1474 = vcmp.lt.s32.totalorder %v274, 111
        %v1475 = vsel %vm1474, %v1471, %v1473
        %v1476 = vsel %vm1474, %v1473, %v1471
        %1477 = vrot.lane.b32.xlu0 %v245, 111
        %v1478 = vpop.permute.xlu0 %1477
        %1479 = vrot.lane.b32.xlu0 %v246, 111
        %v1480 = vpop.permute.xlu0 %1479
        %v1481 = vsel %vm1474, %v1478, %v1480
        %v1482 = vsel %vm1474, %v1480, %v1478
        %s1483 = sld [smem:[#allocation2 + $0x20]]
        %s1484 = sld [smem:[#allocation2 + $0x51]]
        %v1485 = vstv %s1483
        %v1486 = vmul.f32 %v1485, %v1475
        %v1487 = vmul.f32 %v1485, %v1476
        %v1488 = vstv %s1484
        %v1489 = vmul.f32 %v1488, %v1481
        %v1490 = vmul.f32 %v1488, %v1482
        %v1491 = vadd.f32 %v1486, %v1489
        %v1492 = vadd.f32 %v1487, %v1490
        %vm1493 = vmand %vm262, %vm461
        %v1496 = vcombine.low %v1491, %v1492
        %v1498 = vunpack.c.l.s4 1983009808
        %v1499 = vunpack.c.0.s8 %v1498
        %v1500 = vlaneseq
        %v1501 = vshrl.u32 %v1500, 7
        %v1502 = vsub.s32 %v1499, %v1501
        %v1503 = vrot.slane %v1496, %v1502
        %v1505 = vsel %vm1493, %v1503, 0.0
        %v1506 = vadd.f32 %v1469, %v1505
        %1507 = vrot.lane.b32.xlu0 %v223, 110
        %v1508 = vpop.permute.xlu0 %1507
        %1509 = vrot.lane.b32.xlu0 %v230, 110
        %v1510 = vpop.permute.xlu0 %1509
        %vm1511 = vcmp.lt.s32.totalorder %v274, 110
        %v1512 = vsel %vm1511, %v1508, %v1510
        %v1513 = vsel %vm1511, %v1510, %v1508
        %1514 = vrot.lane.b32.xlu0 %v245, 110
        %v1515 = vpop.permute.xlu0 %1514
        %1516 = vrot.lane.b32.xlu0 %v246, 110
        %v1517 = vpop.permute.xlu0 %1516
        %v1518 = vsel %vm1511, %v1515, %v1517
        %v1519 = vsel %vm1511, %v1517, %v1515
        %s1520 = sld [smem:[#allocation2 + $0x21]]
        %s1521 = sld [smem:[#allocation2 + $0x52]]
        %v1522 = vstv %s1520
        %v1523 = vmul.f32 %v1522, %v1512
        %v1524 = vmul.f32 %v1522, %v1513
        %v1525 = vstv %s1521
        %v1526 = vmul.f32 %v1525, %v1518
        %v1527 = vmul.f32 %v1525, %v1519
        %v1528 = vadd.f32 %v1523, %v1526
        %v1529 = vadd.f32 %v1524, %v1527
        %vm1530 = vmand %vm262, %vm502
        %v1533 = vcombine.low %v1528, %v1529
        %v1535 = vunpack.c.l.s4 1983009808
        %v1536 = vunpack.c.0.s8 %v1535
        %v1537 = vlaneseq
        %v1538 = vshrl.u32 %v1537, 7
        %v1539 = vsub.s32 %v1536, %v1538
        %v1540 = vrot.slane %v1533, %v1539
        %v1542 = vsel %vm1530, %v1540, 0.0
        %v1543 = vadd.f32 %v1506, %v1542
        %1544 = vrot.lane.b32.xlu0 %v223, 109
        %v1545 = vpop.permute.xlu0 %1544
        %1546 = vrot.lane.b32.xlu0 %v230, 109
        %v1547 = vpop.permute.xlu0 %1546
        %vm1548 = vcmp.lt.s32.totalorder %v274, 109
        %v1549 = vsel %vm1548, %v1545, %v1547
        %v1550 = vsel %vm1548, %v1547, %v1545
        %1551 = vrot.lane.b32.xlu0 %v245, 109
        %v1552 = vpop.permute.xlu0 %1551
        %1553 = vrot.lane.b32.xlu0 %v246, 109
        %v1554 = vpop.permute.xlu0 %1553
        %v1555 = vsel %vm1548, %v1552, %v1554
        %v1556 = vsel %vm1548, %v1554, %v1552
        %s1557 = sld [smem:[#allocation2 + $0x22]]
        %s1558 = sld [smem:[#allocation2 + $0x53]]
        %v1559 = vstv %s1557
        %v1560 = vmul.f32 %v1559, %v1549
        %v1561 = vmul.f32 %v1559, %v1550
        %v1562 = vstv %s1558
        %v1563 = vmul.f32 %v1562, %v1555
        %v1564 = vmul.f32 %v1562, %v1556
        %v1565 = vadd.f32 %v1560, %v1563
        %v1566 = vadd.f32 %v1561, %v1564
        %vm1567 = vmand %vm262, %vm543
        %v1570 = vcombine.low %v1565, %v1566
        %v1572 = vunpack.c.l.s4 1983009808
        %v1573 = vunpack.c.0.s8 %v1572
        %v1574 = vlaneseq
        %v1575 = vshrl.u32 %v1574, 7
        %v1576 = vsub.s32 %v1573, %v1575
        %v1577 = vrot.slane %v1570, %v1576
        %v1579 = vsel %vm1567, %v1577, 0.0
        %v1580 = vadd.f32 %v1543, %v1579
        %1581 = vrot.lane.b32.xlu0 %v223, 99
        %v1582 = vpop.permute.xlu0 %1581
        %1583 = vrot.lane.b32.xlu0 %v230, 99
        %v1584 = vpop.permute.xlu0 %1583
        %vm1585 = vcmp.lt.s32.totalorder %v274, 99
        %v1586 = vsel %vm1585, %v1582, %v1584
        %v1587 = vsel %vm1585, %v1584, %v1582
        %1588 = vrot.lane.b32.xlu0 %v245, 99
        %v1589 = vpop.permute.xlu0 %1588
        %1590 = vrot.lane.b32.xlu0 %v246, 99
        %v1591 = vpop.permute.xlu0 %1590
        %v1592 = vsel %vm1585, %v1589, %v1591
        %v1593 = vsel %vm1585, %v1591, %v1589
        %s1594 = sld [smem:[#allocation2 + $0x23]]
        %s1595 = sld [smem:[#allocation2 + $0x54]]
        %v1596 = vstv %s1594
        %v1597 = vmul.f32 %v1596, %v1586
        %v1598 = vmul.f32 %v1596, %v1587
        %v1599 = vstv %s1595
        %v1600 = vmul.f32 %v1599, %v1592
        %v1601 = vmul.f32 %v1599, %v1593
        %v1602 = vadd.f32 %v1597, %v1600
        %v1603 = vadd.f32 %v1598, %v1601
        %vm1604 = vmand %vm265, %vm297
        %v1607 = vcombine.low %v1602, %v1603
        %v1609 = vunpack.c.l.s4 1983009808
        %v1610 = vunpack.c.0.s8 %v1609
        %v1611 = vlaneseq
        %v1612 = vshrl.u32 %v1611, 7
        %v1613 = vsub.s32 %v1610, %v1612
        %v1614 = vrot.slane %v1607, %v1613
        %v1616 = vsel %vm1604, %v1614, 0.0
        %v1617 = vadd.f32 %v1580, %v1616
        %1618 = vrot.lane.b32.xlu0 %v223, 98
        %v1619 = vpop.permute.xlu0 %1618
        %1620 = vrot.lane.b32.xlu0 %v230, 98
        %v1621 = vpop.permute.xlu0 %1620
        %vm1622 = vcmp.lt.s32.totalorder %v274, 98
        %v1623 = vsel %vm1622, %v1619, %v1621
        %v1624 = vsel %vm1622, %v1621, %v1619
        %1625 = vrot.lane.b32.xlu0 %v245, 98
        %v1626 = vpop.permute.xlu0 %1625
        %1627 = vrot.lane.b32.xlu0 %v246, 98
        %v1628 = vpop.permute.xlu0 %1627
        %v1629 = vsel %vm1622, %v1626, %v1628
        %v1630 = vsel %vm1622, %v1628, %v1626
        %s1631 = sld [smem:[#allocation2 + $0x24]]
        %s1632 = sld [smem:[#allocation2 + $0x55]]
        %v1633 = vstv %s1631
        %v1634 = vmul.f32 %v1633, %v1623
        %v1635 = vmul.f32 %v1633, %v1624
        %v1636 = vstv %s1632
        %v1637 = vmul.f32 %v1636, %v1629
        %v1638 = vmul.f32 %v1636, %v1630
        %v1639 = vadd.f32 %v1634, %v1637
        %v1640 = vadd.f32 %v1635, %v1638
        %vm1641 = vmand %vm265, %vm338
        %v1644 = vcombine.low %v1639, %v1640
        %v1646 = vunpack.c.l.s4 1983009808
        %v1647 = vunpack.c.0.s8 %v1646
        %v1648 = vlaneseq
        %v1649 = vshrl.u32 %v1648, 7
        %v1650 = vsub.s32 %v1647, %v1649
        %v1651 = vrot.slane %v1644, %v1650
        %v1653 = vsel %vm1641, %v1651, 0.0
        %v1654 = vadd.f32 %v1617, %v1653
        %1655 = vrot.lane.b32.xlu0 %v223, 97
        %v1656 = vpop.permute.xlu0 %1655
        %1657 = vrot.lane.b32.xlu0 %v230, 97
        %v1658 = vpop.permute.xlu0 %1657
        %vm1659 = vcmp.lt.s32.totalorder %v274, 97
        %v1660 = vsel %vm1659, %v1656, %v1658
        %v1661 = vsel %vm1659, %v1658, %v1656
        %1662 = vrot.lane.b32.xlu0 %v245, 97
        %v1663 = vpop.permute.xlu0 %1662
        %1664 = vrot.lane.b32.xlu0 %v246, 97
        %v1665 = vpop.permute.xlu0 %1664
        %v1666 = vsel %vm1659, %v1663, %v1665
        %v1667 = vsel %vm1659, %v1665, %v1663
        %s1668 = sld [smem:[#allocation2 + $0x25]]
        %s1669 = sld [smem:[#allocation2 + $0x56]]
        %v1670 = vstv %s1668
        %v1671 = vmul.f32 %v1670, %v1660
        %v1672 = vmul.f32 %v1670, %v1661
        %v1673 = vstv %s1669
        %v1674 = vmul.f32 %v1673, %v1666
        %v1675 = vmul.f32 %v1673, %v1667
        %v1676 = vadd.f32 %v1671, %v1674
        %v1677 = vadd.f32 %v1672, %v1675
        %vm1678 = vmand %vm265, %vm379
        %v1681 = vcombine.low %v1676, %v1677
        %v1683 = vunpack.c.l.s4 1983009808
        %v1684 = vunpack.c.0.s8 %v1683
        %v1685 = vlaneseq
        %v1686 = vshrl.u32 %v1685, 7
        %v1687 = vsub.s32 %v1684, %v1686
        %v1688 = vrot.slane %v1681, %v1687
        %v1690 = vsel %vm1678, %v1688, 0.0
        %v1691 = vadd.f32 %v1654, %v1690
        %1692 = vrot.lane.b32.xlu0 %v223, 96
        %v1693 = vpop.permute.xlu0 %1692
        %1694 = vrot.lane.b32.xlu0 %v230, 96
        %v1695 = vpop.permute.xlu0 %1694
        %vm1696 = vcmp.lt.s32.totalorder %v274, 96
        %v1697 = vsel %vm1696, %v1693, %v1695
        %v1698 = vsel %vm1696, %v1695, %v1693
        %1699 = vrot.lane.b32.xlu0 %v245, 96
        %v1700 = vpop.permute.xlu0 %1699
        %1701 = vrot.lane.b32.xlu0 %v246, 96
        %v1702 = vpop.permute.xlu0 %1701
        %v1703 = vsel %vm1696, %v1700, %v1702
        %v1704 = vsel %vm1696, %v1702, %v1700
        %s1705 = sld [smem:[#allocation2 + $0x26]]
        %s1706 = sld [smem:[#allocation2 + $0x57]]
        %v1707 = vstv %s1705
        %v1708 = vmul.f32 %v1707, %v1697
        %v1709 = vmul.f32 %v1707, %v1698
        %v1710 = vstv %s1706
        %v1711 = vmul.f32 %v1710, %v1703
        %v1712 = vmul.f32 %v1710, %v1704
        %v1713 = vadd.f32 %v1708, %v1711
        %v1714 = vadd.f32 %v1709, %v1712
        %vm1715 = vmand %vm265, %vm420
        %v1718 = vcombine.low %v1713, %v1714
        %v1720 = vunpack.c.l.s4 1983009808
        %v1721 = vunpack.c.0.s8 %v1720
        %v1722 = vlaneseq
        %v1723 = vshrl.u32 %v1722, 7
        %v1724 = vsub.s32 %v1721, %v1723
        %v1725 = vrot.slane %v1718, %v1724
        %v1727 = vsel %vm1715, %v1725, 0.0
        %v1728 = vadd.f32 %v1691, %v1727
        %1729 = vrot.lane.b32.xlu0 %v223, 95
        %v1730 = vpop.permute.xlu0 %1729
        %1731 = vrot.lane.b32.xlu0 %v230, 95
        %v1732 = vpop.permute.xlu0 %1731
        %vm1733 = vcmp.lt.s32.totalorder %v274, 95
        %v1734 = vsel %vm1733, %v1730, %v1732
        %v1735 = vsel %vm1733, %v1732, %v1730
        %1736 = vrot.lane.b32.xlu0 %v245, 95
        %v1737 = vpop.permute.xlu0 %1736
        %1738 = vrot.lane.b32.xlu0 %v246, 95
        %v1739 = vpop.permute.xlu0 %1738
        %v1740 = vsel %vm1733, %v1737, %v1739
        %v1741 = vsel %vm1733, %v1739, %v1737
        %s1742 = sld [smem:[#allocation2 + $0x27]]
        %s1743 = sld [smem:[#allocation2 + $0x58]]
        %v1744 = vstv %s1742
        %v1745 = vmul.f32 %v1744, %v1734
        %v1746 = vmul.f32 %v1744, %v1735
        %v1747 = vstv %s1743
        %v1748 = vmul.f32 %v1747, %v1740
        %v1749 = vmul.f32 %v1747, %v1741
        %v1750 = vadd.f32 %v1745, %v1748
        %v1751 = vadd.f32 %v1746, %v1749
        %vm1752 = vmand %vm265, %vm461
        %v1755 = vcombine.low %v1750, %v1751
        %v1757 = vunpack.c.l.s4 1983009808
        %v1758 = vunpack.c.0.s8 %v1757
        %v1759 = vlaneseq
        %v1760 = vshrl.u32 %v1759, 7
        %v1761 = vsub.s32 %v1758, %v1760
        %v1762 = vrot.slane %v1755, %v1761
        %v1764 = vsel %vm1752, %v1762, 0.0
        %v1765 = vadd.f32 %v1728, %v1764
        %1766 = vrot.lane.b32.xlu0 %v223, 94
        %v1767 = vpop.permute.xlu0 %1766
        %1768 = vrot.lane.b32.xlu0 %v230, 94
        %v1769 = vpop.permute.xlu0 %1768
        %vm1770 = vcmp.lt.s32.totalorder %v274, 94
        %v1771 = vsel %vm1770, %v1767, %v1769
        %v1772 = vsel %vm1770, %v1769, %v1767
        %1773 = vrot.lane.b32.xlu0 %v245, 94
        %v1774 = vpop.permute.xlu0 %1773
        %1775 = vrot.lane.b32.xlu0 %v246, 94
        %v1776 = vpop.permute.xlu0 %1775
        %v1777 = vsel %vm1770, %v1774, %v1776
        %v1778 = vsel %vm1770, %v1776, %v1774
        %s1779 = sld [smem:[#allocation2 + $0x28]]
        %s1780 = sld [smem:[#allocation2 + $0x59]]
        %v1781 = vstv %s1779
        %v1782 = vmul.f32 %v1781, %v1771
        %v1783 = vmul.f32 %v1781, %v1772
        %v1784 = vstv %s1780
        %v1785 = vmul.f32 %v1784, %v1777
        %v1786 = vmul.f32 %v1784, %v1778
        %v1787 = vadd.f32 %v1782, %v1785
        %v1788 = vadd.f32 %v1783, %v1786
        %vm1789 = vmand %vm265, %vm502
        %v1792 = vcombine.low %v1787, %v1788
        %v1794 = vunpack.c.l.s4 1983009808
        %v1795 = vunpack.c.0.s8 %v1794
        %v1796 = vlaneseq
        %v1797 = vshrl.u32 %v1796, 7
        %v1798 = vsub.s32 %v1795, %v1797
        %v1799 = vrot.slane %v1792, %v1798
        %v1801 = vsel %vm1789, %v1799, 0.0
        %v1802 = vadd.f32 %v1765, %v1801
        %1803 = vrot.lane.b32.xlu0 %v223, 93
        %v1804 = vpop.permute.xlu0 %1803
        %1805 = vrot.lane.b32.xlu0 %v230, 93
        %v1806 = vpop.permute.xlu0 %1805
        %vm1807 = vcmp.lt.s32.totalorder %v274, 93
        %v1808 = vsel %vm1807, %v1804, %v1806
        %v1809 = vsel %vm1807, %v1806, %v1804
        %1810 = vrot.lane.b32.xlu0 %v245, 93
        %v1811 = vpop.permute.xlu0 %1810
        %1812 = vrot.lane.b32.xlu0 %v246, 93
        %v1813 = vpop.permute.xlu0 %1812
        %v1814 = vsel %vm1807, %v1811, %v1813
        %v1815 = vsel %vm1807, %v1813, %v1811
        %s1816 = sld [smem:[#allocation2 + $0x29]]
        %s1817 = sld [smem:[#allocation2 + $0x5a]]
        %v1818 = vstv %s1816
        %v1819 = vmul.f32 %v1818, %v1808
        %v1820 = vmul.f32 %v1818, %v1809
        %v1821 = vstv %s1817
        %v1822 = vmul.f32 %v1821, %v1814
        %v1823 = vmul.f32 %v1821, %v1815
        %v1824 = vadd.f32 %v1819, %v1822
        %v1825 = vadd.f32 %v1820, %v1823
        %vm1826 = vmand %vm265, %vm543
        %v1829 = vcombine.low %v1824, %v1825
        %v1831 = vunpack.c.l.s4 1983009808
        %v1832 = vunpack.c.0.s8 %v1831
        %v1833 = vlaneseq
        %v1834 = vshrl.u32 %v1833, 7
        %v1835 = vsub.s32 %v1832, %v1834
        %v1836 = vrot.slane %v1829, %v1835
        %v1838 = vsel %vm1826, %v1836, 0.0
        %v1839 = vadd.f32 %v1802, %v1838
        %1840 = vrot.lane.b32.xlu0 %v223, 83
        %v1841 = vpop.permute.xlu0 %1840
        %1842 = vrot.lane.b32.xlu0 %v230, 83
        %v1843 = vpop.permute.xlu0 %1842
        %vm1844 = vcmp.lt.s32.totalorder %v274, 83
        %v1845 = vsel %vm1844, %v1841, %v1843
        %v1846 = vsel %vm1844, %v1843, %v1841
        %1847 = vrot.lane.b32.xlu0 %v245, 83
        %v1848 = vpop.permute.xlu0 %1847
        %1849 = vrot.lane.b32.xlu0 %v246, 83
        %v1850 = vpop.permute.xlu0 %1849
        %v1851 = vsel %vm1844, %v1848, %v1850
        %v1852 = vsel %vm1844, %v1850, %v1848
        %s1853 = sld [smem:[#allocation2 + $0x2a]]
        %s1854 = sld [smem:[#allocation2 + $0x5b]]
        %v1855 = vstv %s1853
        %v1856 = vmul.f32 %v1855, %v1845
        %v1857 = vmul.f32 %v1855, %v1846
        %v1858 = vstv %s1854
        %v1859 = vmul.f32 %v1858, %v1851
        %v1860 = vmul.f32 %v1858, %v1852
        %v1861 = vadd.f32 %v1856, %v1859
        %v1862 = vadd.f32 %v1857, %v1860
        %vm1863 = vmand %vm268, %vm297
        %v1866 = vcombine.low %v1861, %v1862
        %v1868 = vunpack.c.l.s4 1983009808
        %v1869 = vunpack.c.0.s8 %v1868
        %v1870 = vlaneseq
        %v1871 = vshrl.u32 %v1870, 7
        %v1872 = vsub.s32 %v1869, %v1871
        %v1873 = vrot.slane %v1866, %v1872
        %v1875 = vsel %vm1863, %v1873, 0.0
        %v1876 = vadd.f32 %v1839, %v1875
        %1877 = vrot.lane.b32.xlu0 %v223, 82
        %v1878 = vpop.permute.xlu0 %1877
        %1879 = vrot.lane.b32.xlu0 %v230, 82
        %v1880 = vpop.permute.xlu0 %1879
        %vm1881 = vcmp.lt.s32.totalorder %v274, 82
        %v1882 = vsel %vm1881, %v1878, %v1880
        %v1883 = vsel %vm1881, %v1880, %v1878
        %1884 = vrot.lane.b32.xlu0 %v245, 82
        %v1885 = vpop.permute.xlu0 %1884
        %1886 = vrot.lane.b32.xlu0 %v246, 82
        %v1887 = vpop.permute.xlu0 %1886
        %v1888 = vsel %vm1881, %v1885, %v1887
        %v1889 = vsel %vm1881, %v1887, %v1885
        %s1890 = sld [smem:[#allocation2 + $0x2b]]
        %s1891 = sld [smem:[#allocation2 + $0x5c]]
        %v1892 = vstv %s1890
        %v1893 = vmul.f32 %v1892, %v1882
        %v1894 = vmul.f32 %v1892, %v1883
        %v1895 = vstv %s1891
        %v1896 = vmul.f32 %v1895, %v1888
        %v1897 = vmul.f32 %v1895, %v1889
        %v1898 = vadd.f32 %v1893, %v1896
        %v1899 = vadd.f32 %v1894, %v1897
        %vm1900 = vmand %vm268, %vm338
        %v1903 = vcombine.low %v1898, %v1899
        %v1905 = vunpack.c.l.s4 1983009808
        %v1906 = vunpack.c.0.s8 %v1905
        %v1907 = vlaneseq
        %v1908 = vshrl.u32 %v1907, 7
        %v1909 = vsub.s32 %v1906, %v1908
        %v1910 = vrot.slane %v1903, %v1909
        %v1912 = vsel %vm1900, %v1910, 0.0
        %v1913 = vadd.f32 %v1876, %v1912
        %1914 = vrot.lane.b32.xlu0 %v223, 81
        %v1915 = vpop.permute.xlu0 %1914
        %1916 = vrot.lane.b32.xlu0 %v230, 81
        %v1917 = vpop.permute.xlu0 %1916
        %vm1918 = vcmp.lt.s32.totalorder %v274, 81
        %v1919 = vsel %vm1918, %v1915, %v1917
        %v1920 = vsel %vm1918, %v1917, %v1915
        %1921 = vrot.lane.b32.xlu0 %v245, 81
        %v1922 = vpop.permute.xlu0 %1921
        %1923 = vrot.lane.b32.xlu0 %v246, 81
        %v1924 = vpop.permute.xlu0 %1923
        %v1925 = vsel %vm1918, %v1922, %v1924
        %v1926 = vsel %vm1918, %v1924, %v1922
        %s1927 = sld [smem:[#allocation2 + $0x2c]]
        %s1928 = sld [smem:[#allocation2 + $0x5d]]
        %v1929 = vstv %s1927
        %v1930 = vmul.f32 %v1929, %v1919
        %v1931 = vmul.f32 %v1929, %v1920
        %v1932 = vstv %s1928
        %v1933 = vmul.f32 %v1932, %v1925
        %v1934 = vmul.f32 %v1932, %v1926
        %v1935 = vadd.f32 %v1930, %v1933
        %v1936 = vadd.f32 %v1931, %v1934
        %vm1937 = vmand %vm268, %vm379
        %v1940 = vcombine.low %v1935, %v1936
        %v1942 = vunpack.c.l.s4 1983009808
        %v1943 = vunpack.c.0.s8 %v1942
        %v1944 = vlaneseq
        %v1945 = vshrl.u32 %v1944, 7
        %v1946 = vsub.s32 %v1943, %v1945
        %v1947 = vrot.slane %v1940, %v1946
        %v1949 = vsel %vm1937, %v1947, 0.0
        %v1950 = vadd.f32 %v1913, %v1949
        %1951 = vrot.lane.b32.xlu0 %v223, 80
        %v1952 = vpop.permute.xlu0 %1951
        %1953 = vrot.lane.b32.xlu0 %v230, 80
        %v1954 = vpop.permute.xlu0 %1953
        %vm1955 = vcmp.lt.s32.totalorder %v274, 80
        %v1956 = vsel %vm1955, %v1952, %v1954
        %v1957 = vsel %vm1955, %v1954, %v1952
        %1958 = vrot.lane.b32.xlu0 %v245, 80
        %v1959 = vpop.permute.xlu0 %1958
        %1960 = vrot.lane.b32.xlu0 %v246, 80
        %v1961 = vpop.permute.xlu0 %1960
        %v1962 = vsel %vm1955, %v1959, %v1961
        %v1963 = vsel %vm1955, %v1961, %v1959
        %s1964 = sld [smem:[#allocation2 + $0x2d]]
        %s1965 = sld [smem:[#allocation2 + $0x5e]]
        %v1966 = vstv %s1964
        %v1967 = vmul.f32 %v1966, %v1956
        %v1968 = vmul.f32 %v1966, %v1957
        %v1969 = vstv %s1965
        %v1970 = vmul.f32 %v1969, %v1962
        %v1971 = vmul.f32 %v1969, %v1963
        %v1972 = vadd.f32 %v1967, %v1970
        %v1973 = vadd.f32 %v1968, %v1971
        %vm1974 = vmand %vm268, %vm420
        %v1977 = vcombine.low %v1972, %v1973
        %v1979 = vunpack.c.l.s4 1983009808
        %v1980 = vunpack.c.0.s8 %v1979
        %v1981 = vlaneseq
        %v1982 = vshrl.u32 %v1981, 7
        %v1983 = vsub.s32 %v1980, %v1982
        %v1984 = vrot.slane %v1977, %v1983
        %v1986 = vsel %vm1974, %v1984, 0.0
        %v1987 = vadd.f32 %v1950, %v1986
        %1988 = vrot.lane.b32.xlu0 %v223, 79
        %v1989 = vpop.permute.xlu0 %1988
        %1990 = vrot.lane.b32.xlu0 %v230, 79
        %v1991 = vpop.permute.xlu0 %1990
        %vm1992 = vcmp.lt.s32.totalorder %v274, 79
        %v1993 = vsel %vm1992, %v1989, %v1991
        %v1994 = vsel %vm1992, %v1991, %v1989
        %1995 = vrot.lane.b32.xlu0 %v245, 79
        %v1996 = vpop.permute.xlu0 %1995
        %1997 = vrot.lane.b32.xlu0 %v246, 79
        %v1998 = vpop.permute.xlu0 %1997
        %v1999 = vsel %vm1992, %v1996, %v1998
        %v2000 = vsel %vm1992, %v1998, %v1996
        %s2001 = sld [smem:[#allocation2 + $0x2e]]
        %s2002 = sld [smem:[#allocation2 + $0x5f]]
        %v2003 = vstv %s2001
        %v2004 = vmul.f32 %v2003, %v1993
        %v2005 = vmul.f32 %v2003, %v1994
        %v2006 = vstv %s2002
        %v2007 = vmul.f32 %v2006, %v1999
        %v2008 = vmul.f32 %v2006, %v2000
        %v2009 = vadd.f32 %v2004, %v2007
        %v2010 = vadd.f32 %v2005, %v2008
        %vm2011 = vmand %vm268, %vm461
        %v2014 = vcombine.low %v2009, %v2010
        %v2016 = vunpack.c.l.s4 1983009808
        %v2017 = vunpack.c.0.s8 %v2016
        %v2018 = vlaneseq
        %v2019 = vshrl.u32 %v2018, 7
        %v2020 = vsub.s32 %v2017, %v2019
        %v2021 = vrot.slane %v2014, %v2020
        %v2023 = vsel %vm2011, %v2021, 0.0
        %v2024 = vadd.f32 %v1987, %v2023
        %2025 = vrot.lane.b32.xlu0 %v223, 78
        %v2026 = vpop.permute.xlu0 %2025
        %2027 = vrot.lane.b32.xlu0 %v230, 78
        %v2028 = vpop.permute.xlu0 %2027
        %vm2029 = vcmp.lt.s32.totalorder %v274, 78
        %v2030 = vsel %vm2029, %v2026, %v2028
        %v2031 = vsel %vm2029, %v2028, %v2026
        %2032 = vrot.lane.b32.xlu0 %v245, 78
        %v2033 = vpop.permute.xlu0 %2032
        %2034 = vrot.lane.b32.xlu0 %v246, 78
        %v2035 = vpop.permute.xlu0 %2034
        %v2036 = vsel %vm2029, %v2033, %v2035
        %v2037 = vsel %vm2029, %v2035, %v2033
        %s2038 = sld [smem:[#allocation2 + $0x2f]]
        %s2039 = sld [smem:[#allocation2 + $0x60]]
        %v2040 = vstv %s2038
        %v2041 = vmul.f32 %v2040, %v2030
        %v2042 = vmul.f32 %v2040, %v2031
        %v2043 = vstv %s2039
        %v2044 = vmul.f32 %v2043, %v2036
        %v2045 = vmul.f32 %v2043, %v2037
        %v2046 = vadd.f32 %v2041, %v2044
        %v2047 = vadd.f32 %v2042, %v2045
        %vm2048 = vmand %vm268, %vm502
        %v2051 = vcombine.low %v2046, %v2047
        %v2053 = vunpack.c.l.s4 1983009808
        %v2054 = vunpack.c.0.s8 %v2053
        %v2055 = vlaneseq
        %v2056 = vshrl.u32 %v2055, 7
        %v2057 = vsub.s32 %v2054, %v2056
        %v2058 = vrot.slane %v2051, %v2057
        %v2060 = vsel %vm2048, %v2058, 0.0
        %v2061 = vadd.f32 %v2024, %v2060
        %2062 = vrot.lane.b32.xlu0 %v223, 77
        %v2063 = vpop.permute.xlu0 %2062
        %2064 = vrot.lane.b32.xlu0 %v230, 77
        %v2065 = vpop.permute.xlu0 %2064
        %vm2066 = vcmp.lt.s32.totalorder %v274, 77
        %v2067 = vsel %vm2066, %v2063, %v2065
        %v2068 = vsel %vm2066, %v2065, %v2063
        %2069 = vrot.lane.b32.xlu0 %v245, 77
        %v2070 = vpop.permute.xlu0 %2069
        %2071 = vrot.lane.b32.xlu0 %v246, 77
        %v2072 = vpop.permute.xlu0 %2071
        %v2073 = vsel %vm2066, %v2070, %v2072
        %v2074 = vsel %vm2066, %v2072, %v2070
        %s2075 = sld [smem:[#allocation2 + $0x30]]
        %s2076 = sld [smem:[#allocation2 + $0x61]]
        %v2077 = vstv %s2075
        %v2078 = vmul.f32 %v2077, %v2067
        %v2079 = vmul.f32 %v2077, %v2068
        %v2080 = vstv %s2076
        %v2081 = vmul.f32 %v2080, %v2073
        %v2082 = vmul.f32 %v2080, %v2074
        %v2083 = vadd.f32 %v2078, %v2081
        %v2084 = vadd.f32 %v2079, %v2082
        %vm2085 = vmand %vm268, %vm543
        %v2088 = vcombine.low %v2083, %v2084
        %v2090 = vunpack.c.l.s4 1983009808
        %v2091 = vunpack.c.0.s8 %v2090
        %v2092 = vlaneseq
        %v2093 = vshrl.u32 %v2092, 7
        %v2094 = vsub.s32 %v2091, %v2093
        %v2095 = vrot.slane %v2088, %v2094
        %v2097 = vsel %vm2085, %v2095, 0.0
        %v2098 = vadd.f32 %v2061, %v2097
        %v2099 = vxor.u32 %v2098, 2147483648
        %v2100 = vmul.f32 %v2099, 1.442695
        %v2101 = vpow.pop %v2100
        %v2102 = vadd.f32 %v2101, 1.0
        %v2103 = vrcp.pop %v2102
        %v2104 = vmul.f32 1.0, %v2103
        %v2106 = vlaneseq
        %v2107 = vshrl.u32 %v2106, 7
        %v2108 = vsub.s32 0, %v2107
        %v2109 = vrot.slane %v2104, %v2108
        %v2110 = vlaneseq
        %v2111 = vshrl.u32 %v2110, 7
        %v2112 = vsub.s32 2, %v2111
        %v2113 = vrot.slane %v2104, %v2112
        %v2116 = vlaneseq
        %v2117 = vshrl.u32 %v2116, 7
        %v2118 = vsub.s32 0, %v2117
        %v2119 = vrot.slane %v2109, %v2118
        %v2120 = vlaneseq
        %v2121 = vshrl.u32 %v2120, 7
        %v2122 = vsub.s32 0, %v2121
        %v2123 = vrot.slane %v2113, %v2122
        %v2126 = vcombine.low %v2119, %v2123
        %v2128 = vmul.f32 %v212, %v2126
        %2129 = vst [vmem:[%s211] sm:$0xff] %v2128
        %s2130 = sand.u32 %s98, 1
        %s2131 = scalar_lea.sflag [#allocation4], %s2130
        %s2132 = sand.u32 %s98, 1
        %s2133 = smul.addr %s2132, 8
        %s2134 = scalar_lea.vmem [#allocation9], %s2133
        // Predicated region
        $region45: #{tpu_custom_call.1} parent=31 // pred_check
          %p2135 = pneg %p108
        $region46: #{tpu_custom_call.1} parent=31 // pred_check_branch
          %2137 = sbr.rel (%p2135) target = $region48
        $region47: #{tpu_custom_call.1} parent=31 // pred_region
          %s2139 = ssub.s32 128, 128
          %2140 = vsyncadd %s2131, %s2139
          %s2141 = smul.addr %s22, 2
          %s2142 = smul.addr %s2141, 64
          %s2143 = scalar_lea.hbm %s3, %s2142
          %s2145 = sshll.u32 %s2134, 4
          %s2146 = int_to_ptr.vmem [resolvable:$true] %s2145
          %2148 = dma.vmem_to_hbm [thread:$0]  %s2146, 128, %s2143, %s2131
        $region48: #{tpu_custom_call.1} parent=31 // pred_fallthru
          _
      $region32: #{tpu_custom_call.1} parent=5 // pred_fallthru
        _
      %p2149 = scmp.le.s32.totalorder 2, %s17
      // Predicated region
      $region49: #{tpu_custom_call.1} parent=5 // pred_check
        %p2150 = pneg %p2149
      $region50: #{tpu_custom_call.1} parent=5 // pred_check_branch
        %2152 = sbr.rel (%p2150) target = $region52
      $region51: #{tpu_custom_call.1} parent=5 // pred_region
        %s2153 = ssub.s32 %s17, 2
        // Predicated region
        $region53: #{tpu_custom_call.1} parent=51 // pred_check
          %p2154 = pneg %p114
        $region54: #{tpu_custom_call.1} parent=51 // pred_check_branch
          %2156 = sbr.rel (%p2154) target = $region56
        $region55: #{tpu_custom_call.1} parent=51 // pred_region
          %s2157 = sand.u32 %s99, 1
          %s2158 = scalar_lea.sflag [#allocation4], %s2157
          %s2159 = sand.u32 %s99, 1
          %s2160 = smul.addr %s2159, 8
          %s2161 = scalar_lea.vmem [#allocation9], %s2160
          %2162 = dma.done %s2158, 128
        $region56: #{tpu_custom_call.1} parent=51 // pred_fallthru
          _
      $region52: #{tpu_custom_call.1} parent=5 // pred_fallthru
        _
    $region6: #{tpu_custom_call.1} parent=1 // loop_footer
      %s21 = sadd.s32 1, %s17
    $region7: #{tpu_custom_call.1} parent=1 // loop_footer_branch
      %16 = sbr.rel target = $region3
    $region8: #{tpu_custom_call.1} parent=1 // loop_exit
      _
    %2163 = vsyncpa [#allocation3], 1
    %s2164 = scalar_lea.sflag [#allocation3], 1
    %2165 = vsyncpa %s2164, 1
    %2166 = vsyncpa [#allocation8], 1
    %s2167 = scalar_lea.sflag [#allocation8], 1
    %2168 = vsyncpa %s2167, 1
    %2169 = vsyncpa [#allocation4], 1
    %s2170 = scalar_lea.sflag [#allocation4], 1
    %2171 = vsyncpa %s2170, 1
    %2172 = vsyncpa [#allocation5], 1
    %s2173 = scalar_lea.sflag [#allocation5], 1
    %2174 = vsyncpa %s2173, 1

</llo_original>
